<compile_context>
chip_gen: v7x
topology: tpu7x:2x2x1
jax: 0.10.0
libtpu: 0.0.40
codegen_flags: <defaults>
</compile_context>

<pallas_src>
import math
import functools

import jax
import jax.numpy as jnp
from jax.experimental import pallas as pl
from jax.experimental.pallas import tpu as pltpu


def _embedding_gather_kernel(ids_ref,      # SMEM (n_total,) int32 token ids (scalar prefetch)
                             table_hbm,    # HBM  (vocab, d_model) embedding table (pl.ANY)
                             o_ref,        # VMEM (tb, d_model) output block
                             row_buf,      # VMEM (2, tb, d_model) double-buffered gather scratch
                             sems,         # DMA semaphores, (2, tb)
                             *, tokens_per_block, scale):
    blk = pl.program_id(0)
    nblk = pl.num_programs(0)
    slot = blk % 2

    def issue(block_idx, buf_slot):
        # Issue all row DMAs for one token block so they overlap in flight.
        base = block_idx * tokens_per_block
        for t in range(tokens_per_block):      # static unrolled (tb is small)
            row = ids_ref[base + t]            # dynamic scalar read from SMEM
            pltpu.make_async_copy(
                table_hbm.at[pl.ds(row, 1)],           # (1, d_model) row in HBM
                row_buf.at[buf_slot, pl.ds(t, 1)],     # (1, d_model) slot in VMEM
                sems.at[buf_slot, t],
            ).start()

    # Prime the pipeline: fetch block 0 into slot 0 on the first grid step.
    @pl.when(blk == 0)
    def _():
        issue(0, 0)

    # Prefetch the NEXT block into the other slot before waiting on this one,
    # hiding its DMA latency behind this step's wait + store + step overhead.
    @pl.when(blk + 1 < nblk)
    def _():
        issue(blk + 1, 1 - slot)

    # Wait for this block's rows (descriptors only need matching sizes/sems).
    for t in range(tokens_per_block):
        pltpu.make_async_copy(
            table_hbm.at[pl.ds(0, 1)],
            row_buf.at[slot, pl.ds(t, 1)],
            sems.at[slot, t],
        ).wait()

    # Scale on the VPU and store the whole lane-dense block at once.
    o_ref[...] = (row_buf[slot] * scale).astype(o_ref.dtype)


def embeddings_forward(token_ids: jnp.ndarray,
                       table: jnp.ndarray,
                       *,
                       tokens_per_block: int = 16) -> jnp.ndarray:
    """token_ids: int (B, S). table: (vocab, d_model). Returns table[ids] * sqrt(d_model)."""
    B, S = token_ids.shape
    vocab, d_model = table.shape
    N = B * S

    ids_flat = token_ids.reshape(N).astype(jnp.int32)

    tb = min(tokens_per_block, N)
    n_pad = (-N) % tb
    if n_pad:
        # Pad with token 0; padded rows are gathered but sliced off below.
        ids_flat = jnp.concatenate([ids_flat, jnp.zeros((n_pad,), jnp.int32)])
    n_total = N + n_pad
    grid = (n_total // tb,)

    scale = math.sqrt(d_model)
    kernel = functools.partial(
        _embedding_gather_kernel, tokens_per_block=tb, scale=scale)

    out_flat = pl.pallas_call(
        kernel,
        out_shape=jax.ShapeDtypeStruct((n_total, d_model), table.dtype),
        grid_spec=pltpu.PrefetchScalarGridSpec(
            num_scalar_prefetch=1,                        # ids -> SMEM before grid runs
            grid=grid,
            in_specs=[pl.BlockSpec(memory_space=pl.ANY)],  # table stays in HBM
            out_specs=pl.BlockSpec((tb, d_model), lambda i, ids: (i, 0)),
            scratch_shapes=[
                pltpu.VMEM((2, tb, d_model), table.dtype),  # double-buffered rows
                pltpu.SemaphoreType.DMA((2, tb)),
            ],
        ),
        compiler_params=pltpu.CompilerParams(
            # Cross-iteration double-buffer state -> keep the grid sequential.
            dimension_semantics=("arbitrary",),
        ),
    )(ids_flat, table)

    return out_flat[:N].reshape(B, S, d_model)


if __name__ == "__main__":
    key = jax.random.PRNGKey(0)
    B, S = 2, 8              # batch, sequence
    d_model = 128            # embedding width (multiple of 128 -> lane-dense stores)
    vocab = 1000

    k_ids, k_tab = jax.random.split(key)
    token_ids = jax.random.randint(k_ids, (B, S), 0, vocab, dtype=jnp.int32)
    table = jax.random.normal(k_tab, (vocab, d_model), dtype=jnp.float32)

    out = embeddings_forward(token_ids, table)
    jax.block_until_ready(out)

    # Reference: plain-JAX gather + scale (matches PyTorch nn.Embedding * sqrt(d_model)).
    ref = table[token_ids] * math.sqrt(d_model)
    assert out.shape == (B, S, d_model)
    assert jnp.allclose(out, ref, atol=1e-6, rtol=1e-6)

    print("KERNEL_OK")
</pallas_src>

<mosaic_0001>
module attributes {stable_mosaic.version = 11 : i64} {
  func.func @_embedding_gather_kernel(%arg0: i32, %arg1: memref<16xi32, #tpu.memory_space<smem>>, %arg2: memref<1000x128xf32, #tpu.memory_space<any>>, %arg3: memref<16x128xf32, #tpu.memory_space<vmem>>, %arg4: memref<2x16x128xf32, #tpu.memory_space<vmem>>, %arg5: memref<2x16x!tpu.dma_semaphore, #tpu.memory_space<semaphore_mem>>) attributes {dimension_semantics = [#tpu.dimension_semantics<arbitrary>], iteration_bounds = array<i64: 1>, scalar_prefetch = 1 : i64, scratch_operands = 2 : i64, tpu.core_type = #tpu.core_type<tc>, window_params = [{}, {transform_indices = @transform_1, window_bounds = array<i64: 16, 128>}]} {
    %c2_i32 = arith.constant 2 : i32
    %c0_i32 = arith.constant 0 : i32
    %0 = arith.cmpi eq, %c2_i32, %c0_i32 : i32
    %c1_i32 = arith.constant 1 : i32
    %1 = arith.select %0, %c1_i32, %c2_i32 : i32
    %2 = arith.remsi %arg0, %1 : i32
    %c0_i32_0 = arith.constant 0 : i32
    %3 = arith.cmpi ne, %2, %c0_i32_0 : i32
    %c0_i32_1 = arith.constant 0 : i32
    %4 = arith.cmpi slt, %2, %c0_i32_1 : i32
    %c0_i32_2 = arith.constant 0 : i32
    %5 = arith.cmpi slt, %1, %c0_i32_2 : i32
    %6 = arith.xori %4, %5 : i1
    %7 = arith.andi %6, %3 : i1
    %8 = arith.addi %2, %1 : i32
    %9 = arith.select %7, %8, %2 : i32
    %c0_i32_3 = arith.constant 0 : i32
    %10 = arith.cmpi eq, %arg0, %c0_i32_3 : i32
    %11 = arith.extui %10 : i1 to i32
    %c0_i32_4 = arith.constant 0 : i32
    %12 = arith.cmpi ne, %11, %c0_i32_4 : i32
    scf.if %12 {
      %c0_78 = arith.constant 0 : index
      %103 = memref.load %arg1[%c0_78] : memref<16xi32, #tpu.memory_space<smem>>
      %c0_i32_79 = arith.constant 0 : i32
      %c0_i32_80 = arith.constant 0 : i32
      %c0_i32_81 = arith.constant 0 : i32
      %c0_i32_82 = arith.constant 0 : i32
      %104 = tpu.memref_slice %arg2[%103, %c0_i32_82] : memref<1000x128xf32, #tpu.memory_space<any>> -> memref<1x128xf32, #tpu.memory_space<any>>
      %c0_i32_83 = arith.constant 0 : i32
      %c0_i32_84 = arith.constant 0 : i32
      %105 = tpu.memref_slice %arg4[%c0_i32_79, %c0_i32_83, %c0_i32_84] : memref<2x16x128xf32, #tpu.memory_space<vmem>> -> memref<1x1x128xf32, #tpu.memory_space<vmem>>
      %106 = tpu.memref_squeeze %105 : memref<1x1x128xf32, #tpu.memory_space<vmem>> -> memref<1x128xf32, #tpu.memory_space<vmem>>
      %107 = tpu.memref_slice %arg5[%c0_i32_80, %c0_i32_81] : memref<2x16x!tpu.dma_semaphore, #tpu.memory_space<semaphore_mem>> -> memref<1x1x!tpu.dma_semaphore, #tpu.memory_space<semaphore_mem>>
      %108 = tpu.memref_squeeze %107 : memref<1x1x!tpu.dma_semaphore, #tpu.memory_space<semaphore_mem>> -> memref<!tpu.dma_semaphore, #tpu.memory_space<semaphore_mem>>
      tpu.enqueue_dma source(%104 : memref<1x128xf32, #tpu.memory_space<any>>) target(%106 : memref<1x128xf32, #tpu.memory_space<vmem>>) target_semaphore(%108 : memref<!tpu.dma_semaphore, #tpu.memory_space<semaphore_mem>>)
      %c1 = arith.constant 1 : index
      %109 = memref.load %arg1[%c1] : memref<16xi32, #tpu.memory_space<smem>>
      %c0_i32_85 = arith.constant 0 : i32
      %c0_i32_86 = arith.constant 0 : i32
      %c1_i32_87 = arith.constant 1 : i32
      %c0_i32_88 = arith.constant 0 : i32
      %110 = tpu.memref_slice %arg2[%109, %c0_i32_88] : memref<1000x128xf32, #tpu.memory_space<any>> -> memref<1x128xf32, #tpu.memory_space<any>>
      %c1_i32_89 = arith.constant 1 : i32
      %c0_i32_90 = arith.constant 0 : i32
      %111 = tpu.memref_slice %arg4[%c0_i32_85, %c1_i32_89, %c0_i32_90] : memref<2x16x128xf32, #tpu.memory_space<vmem>> -> memref<1x1x128xf32, #tpu.memory_space<vmem>>
      %112 = tpu.memref_squeeze %111 : memref<1x1x128xf32, #tpu.memory_space<vmem>> -> memref<1x128xf32, #tpu.memory_space<vmem>>
      %113 = tpu.memref_slice %arg5[%c0_i32_86, %c1_i32_87] : memref<2x16x!tpu.dma_semaphore, #tpu.memory_space<semaphore_mem>> -> memref<1x1x!tpu.dma_semaphore, #tpu.memory_space<semaphore_mem>>
      %114 = tpu.memref_squeeze %113 : memref<1x1x!tpu.dma_semaphore, #tpu.memory_space<semaphore_mem>> -> memref<!tpu.dma_semaphore, #tpu.memory_space<semaphore_mem>>
      tpu.enqueue_dma source(%110 : memref<1x128xf32, #tpu.memory_space<any>>) target(%112 : memref<1x128xf32, #tpu.memory_space<vmem>>) target_semaphore(%114 : memref<!tpu.dma_semaphore, #tpu.memory_space<semaphore_mem>>)
      %c2 = arith.constant 2 : index
      %115 = memref.load %arg1[%c2] : memref<16xi32, #tpu.memory_space<smem>>
      %c0_i32_91 = arith.constant 0 : i32
      %c0_i32_92 = arith.constant 0 : i32
      %c2_i32_93 = arith.constant 2 : i32
      %c0_i32_94 = arith.constant 0 : i32
      %116 = tpu.memref_slice %arg2[%115, %c0_i32_94] : memref<1000x128xf32, #tpu.memory_space<any>> -> memref<1x128xf32, #tpu.memory_space<any>>
      %c2_i32_95 = arith.constant 2 : i32
      %c0_i32_96 = arith.constant 0 : i32
      %117 = tpu.memref_slice %arg4[%c0_i32_91, %c2_i32_95, %c0_i32_96] : memref<2x16x128xf32, #tpu.memory_space<vmem>> -> memref<1x1x128xf32, #tpu.memory_space<vmem>>
      %118 = tpu.memref_squeeze %117 : memref<1x1x128xf32, #tpu.memory_space<vmem>> -> memref<1x128xf32, #tpu.memory_space<vmem>>
      %119 = tpu.memref_slice %arg5[%c0_i32_92, %c2_i32_93] : memref<2x16x!tpu.dma_semaphore, #tpu.memory_space<semaphore_mem>> -> memref<1x1x!tpu.dma_semaphore, #tpu.memory_space<semaphore_mem>>
      %120 = tpu.memref_squeeze %119 : memref<1x1x!tpu.dma_semaphore, #tpu.memory_space<semaphore_mem>> -> memref<!tpu.dma_semaphore, #tpu.memory_space<semaphore_mem>>
      tpu.enqueue_dma source(%116 : memref<1x128xf32, #tpu.memory_space<any>>) target(%118 : memref<1x128xf32, #tpu.memory_space<vmem>>) target_semaphore(%120 : memref<!tpu.dma_semaphore, #tpu.memory_space<semaphore_mem>>)
      %c3 = arith.constant 3 : index
      %121 = memref.load %arg1[%c3] : memref<16xi32, #tpu.memory_space<smem>>
      %c0_i32_97 = arith.constant 0 : i32
      %c0_i32_98 = arith.constant 0 : i32
      %c3_i32_99 = arith.constant 3 : i32
      %c0_i32_100 = arith.constant 0 : i32
      %122 = tpu.memref_slice %arg2[%121, %c0_i32_100] : memref<1000x128xf32, #tpu.memory_space<any>> -> memref<1x128xf32, #tpu.memory_space<any>>
      %c3_i32_101 = arith.constant 3 : i32
      %c0_i32_102 = arith.constant 0 : i32
      %123 = tpu.memref_slice %arg4[%c0_i32_97, %c3_i32_101, %c0_i32_102] : memref<2x16x128xf32, #tpu.memory_space<vmem>> -> memref<1x1x128xf32, #tpu.memory_space<vmem>>
      %124 = tpu.memref_squeeze %123 : memref<1x1x128xf32, #tpu.memory_space<vmem>> -> memref<1x128xf32, #tpu.memory_space<vmem>>
      %125 = tpu.memref_slice %arg5[%c0_i32_98, %c3_i32_99] : memref<2x16x!tpu.dma_semaphore, #tpu.memory_space<semaphore_mem>> -> memref<1x1x!tpu.dma_semaphore, #tpu.memory_space<semaphore_mem>>
      %126 = tpu.memref_squeeze %125 : memref<1x1x!tpu.dma_semaphore, #tpu.memory_space<semaphore_mem>> -> memref<!tpu.dma_semaphore, #tpu.memory_space<semaphore_mem>>
      tpu.enqueue_dma source(%122 : memref<1x128xf32, #tpu.memory_space<any>>) target(%124 : memref<1x128xf32, #tpu.memory_space<vmem>>) target_semaphore(%126 : memref<!tpu.dma_semaphore, #tpu.memory_space<semaphore_mem>>)
      %c4 = arith.constant 4 : index
      %127 = memref.load %arg1[%c4] : memref<16xi32, #tpu.memory_space<smem>>
      %c0_i32_103 = arith.constant 0 : i32
      %c0_i32_104 = arith.constant 0 : i32
      %c4_i32_105 = arith.constant 4 : i32
      %c0_i32_106 = arith.constant 0 : i32
      %128 = tpu.memref_slice %arg2[%127, %c0_i32_106] : memref<1000x128xf32, #tpu.memory_space<any>> -> memref<1x128xf32, #tpu.memory_space<any>>
      %c4_i32_107 = arith.constant 4 : i32
      %c0_i32_108 = arith.constant 0 : i32
      %129 = tpu.memref_slice %arg4[%c0_i32_103, %c4_i32_107, %c0_i32_108] : memref<2x16x128xf32, #tpu.memory_space<vmem>> -> memref<1x1x128xf32, #tpu.memory_space<vmem>>
      %130 = tpu.memref_squeeze %129 : memref<1x1x128xf32, #tpu.memory_space<vmem>> -> memref<1x128xf32, #tpu.memory_space<vmem>>
      %131 = tpu.memref_slice %arg5[%c0_i32_104, %c4_i32_105] : memref<2x16x!tpu.dma_semaphore, #tpu.memory_space<semaphore_mem>> -> memref<1x1x!tpu.dma_semaphore, #tpu.memory_space<semaphore_mem>>
      %132 = tpu.memref_squeeze %131 : memref<1x1x!tpu.dma_semaphore, #tpu.memory_space<semaphore_mem>> -> memref<!tpu.dma_semaphore, #tpu.memory_space<semaphore_mem>>
      tpu.enqueue_dma source(%128 : memref<1x128xf32, #tpu.memory_space<any>>) target(%130 : memref<1x128xf32, #tpu.memory_space<vmem>>) target_semaphore(%132 : memref<!tpu.dma_semaphore, #tpu.memory_space<semaphore_mem>>)
      %c5 = arith.constant 5 : index
      %133 = memref.load %arg1[%c5] : memref<16xi32, #tpu.memory_space<smem>>
      %c0_i32_109 = arith.constant 0 : i32
      %c0_i32_110 = arith.constant 0 : i32
      %c5_i32_111 = arith.constant 5 : i32
      %c0_i32_112 = arith.constant 0 : i32
      %134 = tpu.memref_slice %arg2[%133, %c0_i32_112] : memref<1000x128xf32, #tpu.memory_space<any>> -> memref<1x128xf32, #tpu.memory_space<any>>
      %c5_i32_113 = arith.constant 5 : i32
      %c0_i32_114 = arith.constant 0 : i32
      %135 = tpu.memref_slice %arg4[%c0_i32_109, %c5_i32_113, %c0_i32_114] : memref<2x16x128xf32, #tpu.memory_space<vmem>> -> memref<1x1x128xf32, #tpu.memory_space<vmem>>
      %136 = tpu.memref_squeeze %135 : memref<1x1x128xf32, #tpu.memory_space<vmem>> -> memref<1x128xf32, #tpu.memory_space<vmem>>
      %137 = tpu.memref_slice %arg5[%c0_i32_110, %c5_i32_111] : memref<2x16x!tpu.dma_semaphore, #tpu.memory_space<semaphore_mem>> -> memref<1x1x!tpu.dma_semaphore, #tpu.memory_space<semaphore_mem>>
      %138 = tpu.memref_squeeze %137 : memref<1x1x!tpu.dma_semaphore, #tpu.memory_space<semaphore_mem>> -> memref<!tpu.dma_semaphore, #tpu.memory_space<semaphore_mem>>
      tpu.enqueue_dma source(%134 : memref<1x128xf32, #tpu.memory_space<any>>) target(%136 : memref<1x128xf32, #tpu.memory_space<vmem>>) target_semaphore(%138 : memref<!tpu.dma_semaphore, #tpu.memory_space<semaphore_mem>>)
      %c6 = arith.constant 6 : index
      %139 = memref.load %arg1[%c6] : memref<16xi32, #tpu.memory_space<smem>>
      %c0_i32_115 = arith.constant 0 : i32
      %c0_i32_116 = arith.constant 0 : i32
      %c6_i32_117 = arith.constant 6 : i32
      %c0_i32_118 = arith.constant 0 : i32
      %140 = tpu.memref_slice %arg2[%139, %c0_i32_118] : memref<1000x128xf32, #tpu.memory_space<any>> -> memref<1x128xf32, #tpu.memory_space<any>>
      %c6_i32_119 = arith.constant 6 : i32
      %c0_i32_120 = arith.constant 0 : i32
      %141 = tpu.memref_slice %arg4[%c0_i32_115, %c6_i32_119, %c0_i32_120] : memref<2x16x128xf32, #tpu.memory_space<vmem>> -> memref<1x1x128xf32, #tpu.memory_space<vmem>>
      %142 = tpu.memref_squeeze %141 : memref<1x1x128xf32, #tpu.memory_space<vmem>> -> memref<1x128xf32, #tpu.memory_space<vmem>>
      %143 = tpu.memref_slice %arg5[%c0_i32_116, %c6_i32_117] : memref<2x16x!tpu.dma_semaphore, #tpu.memory_space<semaphore_mem>> -> memref<1x1x!tpu.dma_semaphore, #tpu.memory_space<semaphore_mem>>
      %144 = tpu.memref_squeeze %143 : memref<1x1x!tpu.dma_semaphore, #tpu.memory_space<semaphore_mem>> -> memref<!tpu.dma_semaphore, #tpu.memory_space<semaphore_mem>>
      tpu.enqueue_dma source(%140 : memref<1x128xf32, #tpu.memory_space<any>>) target(%142 : memref<1x128xf32, #tpu.memory_space<vmem>>) target_semaphore(%144 : memref<!tpu.dma_semaphore, #tpu.memory_space<semaphore_mem>>)
      %c7 = arith.constant 7 : index
      %145 = memref.load %arg1[%c7] : memref<16xi32, #tpu.memory_space<smem>>
      %c0_i32_121 = arith.constant 0 : i32
      %c0_i32_122 = arith.constant 0 : i32
      %c7_i32_123 = arith.constant 7 : i32
      %c0_i32_124 = arith.constant 0 : i32
      %146 = tpu.memref_slice %arg2[%145, %c0_i32_124] : memref<1000x128xf32, #tpu.memory_space<any>> -> memref<1x128xf32, #tpu.memory_space<any>>
      %c7_i32_125 = arith.constant 7 : i32
      %c0_i32_126 = arith.constant 0 : i32
      %147 = tpu.memref_slice %arg4[%c0_i32_121, %c7_i32_125, %c0_i32_126] : memref<2x16x128xf32, #tpu.memory_space<vmem>> -> memref<1x1x128xf32, #tpu.memory_space<vmem>>
      %148 = tpu.memref_squeeze %147 : memref<1x1x128xf32, #tpu.memory_space<vmem>> -> memref<1x128xf32, #tpu.memory_space<vmem>>
      %149 = tpu.memref_slice %arg5[%c0_i32_122, %c7_i32_123] : memref<2x16x!tpu.dma_semaphore, #tpu.memory_space<semaphore_mem>> -> memref<1x1x!tpu.dma_semaphore, #tpu.memory_space<semaphore_mem>>
      %150 = tpu.memref_squeeze %149 : memref<1x1x!tpu.dma_semaphore, #tpu.memory_space<semaphore_mem>> -> memref<!tpu.dma_semaphore, #tpu.memory_space<semaphore_mem>>
      tpu.enqueue_dma source(%146 : memref<1x128xf32, #tpu.memory_space<any>>) target(%148 : memref<1x128xf32, #tpu.memory_space<vmem>>) target_semaphore(%150 : memref<!tpu.dma_semaphore, #tpu.memory_space<semaphore_mem>>)
      %c8 = arith.constant 8 : index
      %151 = memref.load %arg1[%c8] : memref<16xi32, #tpu.memory_space<smem>>
      %c0_i32_127 = arith.constant 0 : i32
      %c0_i32_128 = arith.constant 0 : i32
      %c8_i32_129 = arith.constant 8 : i32
      %c0_i32_130 = arith.constant 0 : i32
      %152 = tpu.memref_slice %arg2[%151, %c0_i32_130] : memref<1000x128xf32, #tpu.memory_space<any>> -> memref<1x128xf32, #tpu.memory_space<any>>
      %c8_i32_131 = arith.constant 8 : i32
      %c0_i32_132 = arith.constant 0 : i32
      %153 = tpu.memref_slice %arg4[%c0_i32_127, %c8_i32_131, %c0_i32_132] : memref<2x16x128xf32, #tpu.memory_space<vmem>> -> memref<1x1x128xf32, #tpu.memory_space<vmem>>
      %154 = tpu.memref_squeeze %153 : memref<1x1x128xf32, #tpu.memory_space<vmem>> -> memref<1x128xf32, #tpu.memory_space<vmem>>
      %155 = tpu.memref_slice %arg5[%c0_i32_128, %c8_i32_129] : memref<2x16x!tpu.dma_semaphore, #tpu.memory_space<semaphore_mem>> -> memref<1x1x!tpu.dma_semaphore, #tpu.memory_space<semaphore_mem>>
      %156 = tpu.memref_squeeze %155 : memref<1x1x!tpu.dma_semaphore, #tpu.memory_space<semaphore_mem>> -> memref<!tpu.dma_semaphore, #tpu.memory_space<semaphore_mem>>
      tpu.enqueue_dma source(%152 : memref<1x128xf32, #tpu.memory_space<any>>) target(%154 : memref<1x128xf32, #tpu.memory_space<vmem>>) target_semaphore(%156 : memref<!tpu.dma_semaphore, #tpu.memory_space<semaphore_mem>>)
      %c9 = arith.constant 9 : index
      %157 = memref.load %arg1[%c9] : memref<16xi32, #tpu.memory_space<smem>>
      %c0_i32_133 = arith.constant 0 : i32
      %c0_i32_134 = arith.constant 0 : i32
      %c9_i32_135 = arith.constant 9 : i32
      %c0_i32_136 = arith.constant 0 : i32
      %158 = tpu.memref_slice %arg2[%157, %c0_i32_136] : memref<1000x128xf32, #tpu.memory_space<any>> -> memref<1x128xf32, #tpu.memory_space<any>>
      %c9_i32_137 = arith.constant 9 : i32
      %c0_i32_138 = arith.constant 0 : i32
      %159 = tpu.memref_slice %arg4[%c0_i32_133, %c9_i32_137, %c0_i32_138] : memref<2x16x128xf32, #tpu.memory_space<vmem>> -> memref<1x1x128xf32, #tpu.memory_space<vmem>>
      %160 = tpu.memref_squeeze %159 : memref<1x1x128xf32, #tpu.memory_space<vmem>> -> memref<1x128xf32, #tpu.memory_space<vmem>>
      %161 = tpu.memref_slice %arg5[%c0_i32_134, %c9_i32_135] : memref<2x16x!tpu.dma_semaphore, #tpu.memory_space<semaphore_mem>> -> memref<1x1x!tpu.dma_semaphore, #tpu.memory_space<semaphore_mem>>
      %162 = tpu.memref_squeeze %161 : memref<1x1x!tpu.dma_semaphore, #tpu.memory_space<semaphore_mem>> -> memref<!tpu.dma_semaphore, #tpu.memory_space<semaphore_mem>>
      tpu.enqueue_dma source(%158 : memref<1x128xf32, #tpu.memory_space<any>>) target(%160 : memref<1x128xf32, #tpu.memory_space<vmem>>) target_semaphore(%162 : memref<!tpu.dma_semaphore, #tpu.memory_space<semaphore_mem>>)
      %c10 = arith.constant 10 : index
      %163 = memref.load %arg1[%c10] : memref<16xi32, #tpu.memory_space<smem>>
      %c0_i32_139 = arith.constant 0 : i32
      %c0_i32_140 = arith.constant 0 : i32
      %c10_i32_141 = arith.constant 10 : i32
      %c0_i32_142 = arith.constant 0 : i32
      %164 = tpu.memref_slice %arg2[%163, %c0_i32_142] : memref<1000x128xf32, #tpu.memory_space<any>> -> memref<1x128xf32, #tpu.memory_space<any>>
      %c10_i32_143 = arith.constant 10 : i32
      %c0_i32_144 = arith.constant 0 : i32
      %165 = tpu.memref_slice %arg4[%c0_i32_139, %c10_i32_143, %c0_i32_144] : memref<2x16x128xf32, #tpu.memory_space<vmem>> -> memref<1x1x128xf32, #tpu.memory_space<vmem>>
      %166 = tpu.memref_squeeze %165 : memref<1x1x128xf32, #tpu.memory_space<vmem>> -> memref<1x128xf32, #tpu.memory_space<vmem>>
      %167 = tpu.memref_slice %arg5[%c0_i32_140, %c10_i32_141] : memref<2x16x!tpu.dma_semaphore, #tpu.memory_space<semaphore_mem>> -> memref<1x1x!tpu.dma_semaphore, #tpu.memory_space<semaphore_mem>>
      %168 = tpu.memref_squeeze %167 : memref<1x1x!tpu.dma_semaphore, #tpu.memory_space<semaphore_mem>> -> memref<!tpu.dma_semaphore, #tpu.memory_space<semaphore_mem>>
      tpu.enqueue_dma source(%164 : memref<1x128xf32, #tpu.memory_space<any>>) target(%166 : memref<1x128xf32, #tpu.memory_space<vmem>>) target_semaphore(%168 : memref<!tpu.dma_semaphore, #tpu.memory_space<semaphore_mem>>)
      %c11 = arith.constant 11 : index
      %169 = memref.load %arg1[%c11] : memref<16xi32, #tpu.memory_space<smem>>
      %c0_i32_145 = arith.constant 0 : i32
      %c0_i32_146 = arith.constant 0 : i32
      %c11_i32_147 = arith.constant 11 : i32
      %c0_i32_148 = arith.constant 0 : i32
      %170 = tpu.memref_slice %arg2[%169, %c0_i32_148] : memref<1000x128xf32, #tpu.memory_space<any>> -> memref<1x128xf32, #tpu.memory_space<any>>
      %c11_i32_149 = arith.constant 11 : i32
      %c0_i32_150 = arith.constant 0 : i32
      %171 = tpu.memref_slice %arg4[%c0_i32_145, %c11_i32_149, %c0_i32_150] : memref<2x16x128xf32, #tpu.memory_space<vmem>> -> memref<1x1x128xf32, #tpu.memory_space<vmem>>
      %172 = tpu.memref_squeeze %171 : memref<1x1x128xf32, #tpu.memory_space<vmem>> -> memref<1x128xf32, #tpu.memory_space<vmem>>
      %173 = tpu.memref_slice %arg5[%c0_i32_146, %c11_i32_147] : memref<2x16x!tpu.dma_semaphore, #tpu.memory_space<semaphore_mem>> -> memref<1x1x!tpu.dma_semaphore, #tpu.memory_space<semaphore_mem>>
      %174 = tpu.memref_squeeze %173 : memref<1x1x!tpu.dma_semaphore, #tpu.memory_space<semaphore_mem>> -> memref<!tpu.dma_semaphore, #tpu.memory_space<semaphore_mem>>
      tpu.enqueue_dma source(%170 : memref<1x128xf32, #tpu.memory_space<any>>) target(%172 : memref<1x128xf32, #tpu.memory_space<vmem>>) target_semaphore(%174 : memref<!tpu.dma_semaphore, #tpu.memory_space<semaphore_mem>>)
      %c12 = arith.constant 12 : index
      %175 = memref.load %arg1[%c12] : memref<16xi32, #tpu.memory_space<smem>>
      %c0_i32_151 = arith.constant 0 : i32
      %c0_i32_152 = arith.constant 0 : i32
      %c12_i32_153 = arith.constant 12 : i32
      %c0_i32_154 = arith.constant 0 : i32
      %176 = tpu.memref_slice %arg2[%175, %c0_i32_154] : memref<1000x128xf32, #tpu.memory_space<any>> -> memref<1x128xf32, #tpu.memory_space<any>>
      %c12_i32_155 = arith.constant 12 : i32
      %c0_i32_156 = arith.constant 0 : i32
      %177 = tpu.memref_slice %arg4[%c0_i32_151, %c12_i32_155, %c0_i32_156] : memref<2x16x128xf32, #tpu.memory_space<vmem>> -> memref<1x1x128xf32, #tpu.memory_space<vmem>>
      %178 = tpu.memref_squeeze %177 : memref<1x1x128xf32, #tpu.memory_space<vmem>> -> memref<1x128xf32, #tpu.memory_space<vmem>>
      %179 = tpu.memref_slice %arg5[%c0_i32_152, %c12_i32_153] : memref<2x16x!tpu.dma_semaphore, #tpu.memory_space<semaphore_mem>> -> memref<1x1x!tpu.dma_semaphore, #tpu.memory_space<semaphore_mem>>
      %180 = tpu.memref_squeeze %179 : memref<1x1x!tpu.dma_semaphore, #tpu.memory_space<semaphore_mem>> -> memref<!tpu.dma_semaphore, #tpu.memory_space<semaphore_mem>>
      tpu.enqueue_dma source(%176 : memref<1x128xf32, #tpu.memory_space<any>>) target(%178 : memref<1x128xf32, #tpu.memory_space<vmem>>) target_semaphore(%180 : memref<!tpu.dma_semaphore, #tpu.memory_space<semaphore_mem>>)
      %c13 = arith.constant 13 : index
      %181 = memref.load %arg1[%c13] : memref<16xi32, #tpu.memory_space<smem>>
      %c0_i32_157 = arith.constant 0 : i32
      %c0_i32_158 = arith.constant 0 : i32
      %c13_i32_159 = arith.constant 13 : i32
      %c0_i32_160 = arith.constant 0 : i32
      %182 = tpu.memref_slice %arg2[%181, %c0_i32_160] : memref<1000x128xf32, #tpu.memory_space<any>> -> memref<1x128xf32, #tpu.memory_space<any>>
      %c13_i32_161 = arith.constant 13 : i32
      %c0_i32_162 = arith.constant 0 : i32
      %183 = tpu.memref_slice %arg4[%c0_i32_157, %c13_i32_161, %c0_i32_162] : memref<2x16x128xf32, #tpu.memory_space<vmem>> -> memref<1x1x128xf32, #tpu.memory_space<vmem>>
      %184 = tpu.memref_squeeze %183 : memref<1x1x128xf32, #tpu.memory_space<vmem>> -> memref<1x128xf32, #tpu.memory_space<vmem>>
      %185 = tpu.memref_slice %arg5[%c0_i32_158, %c13_i32_159] : memref<2x16x!tpu.dma_semaphore, #tpu.memory_space<semaphore_mem>> -> memref<1x1x!tpu.dma_semaphore, #tpu.memory_space<semaphore_mem>>
      %186 = tpu.memref_squeeze %185 : memref<1x1x!tpu.dma_semaphore, #tpu.memory_space<semaphore_mem>> -> memref<!tpu.dma_semaphore, #tpu.memory_space<semaphore_mem>>
      tpu.enqueue_dma source(%182 : memref<1x128xf32, #tpu.memory_space<any>>) target(%184 : memref<1x128xf32, #tpu.memory_space<vmem>>) target_semaphore(%186 : memref<!tpu.dma_semaphore, #tpu.memory_space<semaphore_mem>>)
      %c14 = arith.constant 14 : index
      %187 = memref.load %arg1[%c14] : memref<16xi32, #tpu.memory_space<smem>>
      %c0_i32_163 = arith.constant 0 : i32
      %c0_i32_164 = arith.constant 0 : i32
      %c14_i32_165 = arith.constant 14 : i32
      %c0_i32_166 = arith.constant 0 : i32
      %188 = tpu.memref_slice %arg2[%187, %c0_i32_166] : memref<1000x128xf32, #tpu.memory_space<any>> -> memref<1x128xf32, #tpu.memory_space<any>>
      %c14_i32_167 = arith.constant 14 : i32
      %c0_i32_168 = arith.constant 0 : i32
      %189 = tpu.memref_slice %arg4[%c0_i32_163, %c14_i32_167, %c0_i32_168] : memref<2x16x128xf32, #tpu.memory_space<vmem>> -> memref<1x1x128xf32, #tpu.memory_space<vmem>>
      %190 = tpu.memref_squeeze %189 : memref<1x1x128xf32, #tpu.memory_space<vmem>> -> memref<1x128xf32, #tpu.memory_space<vmem>>
      %191 = tpu.memref_slice %arg5[%c0_i32_164, %c14_i32_165] : memref<2x16x!tpu.dma_semaphore, #tpu.memory_space<semaphore_mem>> -> memref<1x1x!tpu.dma_semaphore, #tpu.memory_space<semaphore_mem>>
      %192 = tpu.memref_squeeze %191 : memref<1x1x!tpu.dma_semaphore, #tpu.memory_space<semaphore_mem>> -> memref<!tpu.dma_semaphore, #tpu.memory_space<semaphore_mem>>
      tpu.enqueue_dma source(%188 : memref<1x128xf32, #tpu.memory_space<any>>) target(%190 : memref<1x128xf32, #tpu.memory_space<vmem>>) target_semaphore(%192 : memref<!tpu.dma_semaphore, #tpu.memory_space<semaphore_mem>>)
      %c15 = arith.constant 15 : index
      %193 = memref.load %arg1[%c15] : memref<16xi32, #tpu.memory_space<smem>>
      %c0_i32_169 = arith.constant 0 : i32
      %c0_i32_170 = arith.constant 0 : i32
      %c15_i32_171 = arith.constant 15 : i32
      %c0_i32_172 = arith.constant 0 : i32
      %194 = tpu.memref_slice %arg2[%193, %c0_i32_172] : memref<1000x128xf32, #tpu.memory_space<any>> -> memref<1x128xf32, #tpu.memory_space<any>>
      %c15_i32_173 = arith.constant 15 : i32
      %c0_i32_174 = arith.constant 0 : i32
      %195 = tpu.memref_slice %arg4[%c0_i32_169, %c15_i32_173, %c0_i32_174] : memref<2x16x128xf32, #tpu.memory_space<vmem>> -> memref<1x1x128xf32, #tpu.memory_space<vmem>>
      %196 = tpu.memref_squeeze %195 : memref<1x1x128xf32, #tpu.memory_space<vmem>> -> memref<1x128xf32, #tpu.memory_space<vmem>>
      %197 = tpu.memref_slice %arg5[%c0_i32_170, %c15_i32_171] : memref<2x16x!tpu.dma_semaphore, #tpu.memory_space<semaphore_mem>> -> memref<1x1x!tpu.dma_semaphore, #tpu.memory_space<semaphore_mem>>
      %198 = tpu.memref_squeeze %197 : memref<1x1x!tpu.dma_semaphore, #tpu.memory_space<semaphore_mem>> -> memref<!tpu.dma_semaphore, #tpu.memory_space<semaphore_mem>>
      tpu.enqueue_dma source(%194 : memref<1x128xf32, #tpu.memory_space<any>>) target(%196 : memref<1x128xf32, #tpu.memory_space<vmem>>) target_semaphore(%198 : memref<!tpu.dma_semaphore, #tpu.memory_space<semaphore_mem>>)
    } else {
    }
    %c1_i32_5 = arith.constant 1 : i32
    %13 = arith.addi %arg0, %c1_i32_5 : i32
    %c1_i32_6 = arith.constant 1 : i32
    %14 = arith.cmpi slt, %13, %c1_i32_6 : i32
    %15 = arith.extui %14 : i1 to i32
    %c0_i32_7 = arith.constant 0 : i32
    %16 = arith.cmpi ne, %15, %c0_i32_7 : i32
    scf.if %16 {
      %c1_i32_78 = arith.constant 1 : i32
      %103 = arith.addi %arg0, %c1_i32_78 : i32
      %c1_i32_79 = arith.constant 1 : i32
      %104 = arith.subi %c1_i32_79, %9 : i32
      %c16_i32 = arith.constant 16 : i32
      %105 = arith.muli %103, %c16_i32 : i32
      %c0_i32_80 = arith.constant 0 : i32
      %106 = arith.addi %105, %c0_i32_80 : i32
      %107 = arith.index_cast %106 : i32 to index
      %108 = memref.load %arg1[%107] : memref<16xi32, #tpu.memory_space<smem>>
      %c0_i32_81 = arith.constant 0 : i32
      %c0_i32_82 = arith.constant 0 : i32
      %109 = tpu.memref_slice %arg2[%108, %c0_i32_82] : memref<1000x128xf32, #tpu.memory_space<any>> -> memref<1x128xf32, #tpu.memory_space<any>>
      %c0_i32_83 = arith.constant 0 : i32
      %c0_i32_84 = arith.constant 0 : i32
      %110 = tpu.memref_slice %arg4[%104, %c0_i32_83, %c0_i32_84] : memref<2x16x128xf32, #tpu.memory_space<vmem>> -> memref<1x1x128xf32, #tpu.memory_space<vmem>>
      %111 = tpu.memref_squeeze %110 : memref<1x1x128xf32, #tpu.memory_space<vmem>> -> memref<1x128xf32, #tpu.memory_space<vmem>>
      %112 = tpu.memref_slice %arg5[%104, %c0_i32_81] : memref<2x16x!tpu.dma_semaphore, #tpu.memory_space<semaphore_mem>> -> memref<1x1x!tpu.dma_semaphore, #tpu.memory_space<semaphore_mem>>
      %113 = tpu.memref_squeeze %112 : memref<1x1x!tpu.dma_semaphore, #tpu.memory_space<semaphore_mem>> -> memref<!tpu.dma_semaphore, #tpu.memory_space<semaphore_mem>>
      tpu.enqueue_dma source(%109 : memref<1x128xf32, #tpu.memory_space<any>>) target(%111 : memref<1x128xf32, #tpu.memory_space<vmem>>) target_semaphore(%113 : memref<!tpu.dma_semaphore, #tpu.memory_space<semaphore_mem>>)
      %c1_i32_85 = arith.constant 1 : i32
      %114 = arith.addi %105, %c1_i32_85 : i32
      %115 = arith.index_cast %114 : i32 to index
      %116 = memref.load %arg1[%115] : memref<16xi32, #tpu.memory_space<smem>>
      %c1_i32_86 = arith.constant 1 : i32
      %c0_i32_87 = arith.constant 0 : i32
      %117 = tpu.memref_slice %arg2[%116, %c0_i32_87] : memref<1000x128xf32, #tpu.memory_space<any>> -> memref<1x128xf32, #tpu.memory_space<any>>
      %c1_i32_88 = arith.constant 1 : i32
      %c0_i32_89 = arith.constant 0 : i32
      %118 = tpu.memref_slice %arg4[%104, %c1_i32_88, %c0_i32_89] : memref<2x16x128xf32, #tpu.memory_space<vmem>> -> memref<1x1x128xf32, #tpu.memory_space<vmem>>
      %119 = tpu.memref_squeeze %118 : memref<1x1x128xf32, #tpu.memory_space<vmem>> -> memref<1x128xf32, #tpu.memory_space<vmem>>
      %120 = tpu.memref_slice %arg5[%104, %c1_i32_86] : memref<2x16x!tpu.dma_semaphore, #tpu.memory_space<semaphore_mem>> -> memref<1x1x!tpu.dma_semaphore, #tpu.memory_space<semaphore_mem>>
      %121 = tpu.memref_squeeze %120 : memref<1x1x!tpu.dma_semaphore, #tpu.memory_space<semaphore_mem>> -> memref<!tpu.dma_semaphore, #tpu.memory_space<semaphore_mem>>
      tpu.enqueue_dma source(%117 : memref<1x128xf32, #tpu.memory_space<any>>) target(%119 : memref<1x128xf32, #tpu.memory_space<vmem>>) target_semaphore(%121 : memref<!tpu.dma_semaphore, #tpu.memory_space<semaphore_mem>>)
      %c2_i32_90 = arith.constant 2 : i32
      %122 = arith.addi %105, %c2_i32_90 : i32
      %123 = arith.index_cast %122 : i32 to index
      %124 = memref.load %arg1[%123] : memref<16xi32, #tpu.memory_space<smem>>
      %c2_i32_91 = arith.constant 2 : i32
      %c0_i32_92 = arith.constant 0 : i32
      %125 = tpu.memref_slice %arg2[%124, %c0_i32_92] : memref<1000x128xf32, #tpu.memory_space<any>> -> memref<1x128xf32, #tpu.memory_space<any>>
      %c2_i32_93 = arith.constant 2 : i32
      %c0_i32_94 = arith.constant 0 : i32
      %126 = tpu.memref_slice %arg4[%104, %c2_i32_93, %c0_i32_94] : memref<2x16x128xf32, #tpu.memory_space<vmem>> -> memref<1x1x128xf32, #tpu.memory_space<vmem>>
      %127 = tpu.memref_squeeze %126 : memref<1x1x128xf32, #tpu.memory_space<vmem>> -> memref<1x128xf32, #tpu.memory_space<vmem>>
      %128 = tpu.memref_slice %arg5[%104, %c2_i32_91] : memref<2x16x!tpu.dma_semaphore, #tpu.memory_space<semaphore_mem>> -> memref<1x1x!tpu.dma_semaphore, #tpu.memory_space<semaphore_mem>>
      %129 = tpu.memref_squeeze %128 : memref<1x1x!tpu.dma_semaphore, #tpu.memory_space<semaphore_mem>> -> memref<!tpu.dma_semaphore, #tpu.memory_space<semaphore_mem>>
      tpu.enqueue_dma source(%125 : memref<1x128xf32, #tpu.memory_space<any>>) target(%127 : memref<1x128xf32, #tpu.memory_space<vmem>>) target_semaphore(%129 : memref<!tpu.dma_semaphore, #tpu.memory_space<semaphore_mem>>)
      %c3_i32_95 = arith.constant 3 : i32
      %130 = arith.addi %105, %c3_i32_95 : i32
      %131 = arith.index_cast %130 : i32 to index
      %132 = memref.load %arg1[%131] : memref<16xi32, #tpu.memory_space<smem>>
      %c3_i32_96 = arith.constant 3 : i32
      %c0_i32_97 = arith.constant 0 : i32
      %133 = tpu.memref_slice %arg2[%132, %c0_i32_97] : memref<1000x128xf32, #tpu.memory_space<any>> -> memref<1x128xf32, #tpu.memory_space<any>>
      %c3_i32_98 = arith.constant 3 : i32
      %c0_i32_99 = arith.constant 0 : i32
      %134 = tpu.memref_slice %arg4[%104, %c3_i32_98, %c0_i32_99] : memref<2x16x128xf32, #tpu.memory_space<vmem>> -> memref<1x1x128xf32, #tpu.memory_space<vmem>>
      %135 = tpu.memref_squeeze %134 : memref<1x1x128xf32, #tpu.memory_space<vmem>> -> memref<1x128xf32, #tpu.memory_space<vmem>>
      %136 = tpu.memref_slice %arg5[%104, %c3_i32_96] : memref<2x16x!tpu.dma_semaphore, #tpu.memory_space<semaphore_mem>> -> memref<1x1x!tpu.dma_semaphore, #tpu.memory_space<semaphore_mem>>
      %137 = tpu.memref_squeeze %136 : memref<1x1x!tpu.dma_semaphore, #tpu.memory_space<semaphore_mem>> -> memref<!tpu.dma_semaphore, #tpu.memory_space<semaphore_mem>>
      tpu.enqueue_dma source(%133 : memref<1x128xf32, #tpu.memory_space<any>>) target(%135 : memref<1x128xf32, #tpu.memory_space<vmem>>) target_semaphore(%137 : memref<!tpu.dma_semaphore, #tpu.memory_space<semaphore_mem>>)
      %c4_i32_100 = arith.constant 4 : i32
      %138 = arith.addi %105, %c4_i32_100 : i32
      %139 = arith.index_cast %138 : i32 to index
      %140 = memref.load %arg1[%139] : memref<16xi32, #tpu.memory_space<smem>>
      %c4_i32_101 = arith.constant 4 : i32
      %c0_i32_102 = arith.constant 0 : i32
      %141 = tpu.memref_slice %arg2[%140, %c0_i32_102] : memref<1000x128xf32, #tpu.memory_space<any>> -> memref<1x128xf32, #tpu.memory_space<any>>
      %c4_i32_103 = arith.constant 4 : i32
      %c0_i32_104 = arith.constant 0 : i32
      %142 = tpu.memref_slice %arg4[%104, %c4_i32_103, %c0_i32_104] : memref<2x16x128xf32, #tpu.memory_space<vmem>> -> memref<1x1x128xf32, #tpu.memory_space<vmem>>
      %143 = tpu.memref_squeeze %142 : memref<1x1x128xf32, #tpu.memory_space<vmem>> -> memref<1x128xf32, #tpu.memory_space<vmem>>
      %144 = tpu.memref_slice %arg5[%104, %c4_i32_101] : memref<2x16x!tpu.dma_semaphore, #tpu.memory_space<semaphore_mem>> -> memref<1x1x!tpu.dma_semaphore, #tpu.memory_space<semaphore_mem>>
      %145 = tpu.memref_squeeze %144 : memref<1x1x!tpu.dma_semaphore, #tpu.memory_space<semaphore_mem>> -> memref<!tpu.dma_semaphore, #tpu.memory_space<semaphore_mem>>
      tpu.enqueue_dma source(%141 : memref<1x128xf32, #tpu.memory_space<any>>) target(%143 : memref<1x128xf32, #tpu.memory_space<vmem>>) target_semaphore(%145 : memref<!tpu.dma_semaphore, #tpu.memory_space<semaphore_mem>>)
      %c5_i32_105 = arith.constant 5 : i32
      %146 = arith.addi %105, %c5_i32_105 : i32
      %147 = arith.index_cast %146 : i32 to index
      %148 = memref.load %arg1[%147] : memref<16xi32, #tpu.memory_space<smem>>
      %c5_i32_106 = arith.constant 5 : i32
      %c0_i32_107 = arith.constant 0 : i32
      %149 = tpu.memref_slice %arg2[%148, %c0_i32_107] : memref<1000x128xf32, #tpu.memory_space<any>> -> memref<1x128xf32, #tpu.memory_space<any>>
      %c5_i32_108 = arith.constant 5 : i32
      %c0_i32_109 = arith.constant 0 : i32
      %150 = tpu.memref_slice %arg4[%104, %c5_i32_108, %c0_i32_109] : memref<2x16x128xf32, #tpu.memory_space<vmem>> -> memref<1x1x128xf32, #tpu.memory_space<vmem>>
      %151 = tpu.memref_squeeze %150 : memref<1x1x128xf32, #tpu.memory_space<vmem>> -> memref<1x128xf32, #tpu.memory_space<vmem>>
      %152 = tpu.memref_slice %arg5[%104, %c5_i32_106] : memref<2x16x!tpu.dma_semaphore, #tpu.memory_space<semaphore_mem>> -> memref<1x1x!tpu.dma_semaphore, #tpu.memory_space<semaphore_mem>>
      %153 = tpu.memref_squeeze %152 : memref<1x1x!tpu.dma_semaphore, #tpu.memory_space<semaphore_mem>> -> memref<!tpu.dma_semaphore, #tpu.memory_space<semaphore_mem>>
      tpu.enqueue_dma source(%149 : memref<1x128xf32, #tpu.memory_space<any>>) target(%151 : memref<1x128xf32, #tpu.memory_space<vmem>>) target_semaphore(%153 : memref<!tpu.dma_semaphore, #tpu.memory_space<semaphore_mem>>)
      %c6_i32_110 = arith.constant 6 : i32
      %154 = arith.addi %105, %c6_i32_110 : i32
      %155 = arith.index_cast %154 : i32 to index
      %156 = memref.load %arg1[%155] : memref<16xi32, #tpu.memory_space<smem>>
      %c6_i32_111 = arith.constant 6 : i32
      %c0_i32_112 = arith.constant 0 : i32
      %157 = tpu.memref_slice %arg2[%156, %c0_i32_112] : memref<1000x128xf32, #tpu.memory_space<any>> -> memref<1x128xf32, #tpu.memory_space<any>>
      %c6_i32_113 = arith.constant 6 : i32
      %c0_i32_114 = arith.constant 0 : i32
      %158 = tpu.memref_slice %arg4[%104, %c6_i32_113, %c0_i32_114] : memref<2x16x128xf32, #tpu.memory_space<vmem>> -> memref<1x1x128xf32, #tpu.memory_space<vmem>>
      %159 = tpu.memref_squeeze %158 : memref<1x1x128xf32, #tpu.memory_space<vmem>> -> memref<1x128xf32, #tpu.memory_space<vmem>>
      %160 = tpu.memref_slice %arg5[%104, %c6_i32_111] : memref<2x16x!tpu.dma_semaphore, #tpu.memory_space<semaphore_mem>> -> memref<1x1x!tpu.dma_semaphore, #tpu.memory_space<semaphore_mem>>
      %161 = tpu.memref_squeeze %160 : memref<1x1x!tpu.dma_semaphore, #tpu.memory_space<semaphore_mem>> -> memref<!tpu.dma_semaphore, #tpu.memory_space<semaphore_mem>>
      tpu.enqueue_dma source(%157 : memref<1x128xf32, #tpu.memory_space<any>>) target(%159 : memref<1x128xf32, #tpu.memory_space<vmem>>) target_semaphore(%161 : memref<!tpu.dma_semaphore, #tpu.memory_space<semaphore_mem>>)
      %c7_i32_115 = arith.constant 7 : i32
      %162 = arith.addi %105, %c7_i32_115 : i32
      %163 = arith.index_cast %162 : i32 to index
      %164 = memref.load %arg1[%163] : memref<16xi32, #tpu.memory_space<smem>>
      %c7_i32_116 = arith.constant 7 : i32
      %c0_i32_117 = arith.constant 0 : i32
      %165 = tpu.memref_slice %arg2[%164, %c0_i32_117] : memref<1000x128xf32, #tpu.memory_space<any>> -> memref<1x128xf32, #tpu.memory_space<any>>
      %c7_i32_118 = arith.constant 7 : i32
      %c0_i32_119 = arith.constant 0 : i32
      %166 = tpu.memref_slice %arg4[%104, %c7_i32_118, %c0_i32_119] : memref<2x16x128xf32, #tpu.memory_space<vmem>> -> memref<1x1x128xf32, #tpu.memory_space<vmem>>
      %167 = tpu.memref_squeeze %166 : memref<1x1x128xf32, #tpu.memory_space<vmem>> -> memref<1x128xf32, #tpu.memory_space<vmem>>
      %168 = tpu.memref_slice %arg5[%104, %c7_i32_116] : memref<2x16x!tpu.dma_semaphore, #tpu.memory_space<semaphore_mem>> -> memref<1x1x!tpu.dma_semaphore, #tpu.memory_space<semaphore_mem>>
      %169 = tpu.memref_squeeze %168 : memref<1x1x!tpu.dma_semaphore, #tpu.memory_space<semaphore_mem>> -> memref<!tpu.dma_semaphore, #tpu.memory_space<semaphore_mem>>
      tpu.enqueue_dma source(%165 : memref<1x128xf32, #tpu.memory_space<any>>) target(%167 : memref<1x128xf32, #tpu.memory_space<vmem>>) target_semaphore(%169 : memref<!tpu.dma_semaphore, #tpu.memory_space<semaphore_mem>>)
      %c8_i32_120 = arith.constant 8 : i32
      %170 = arith.addi %105, %c8_i32_120 : i32
      %171 = arith.index_cast %170 : i32 to index
      %172 = memref.load %arg1[%171] : memref<16xi32, #tpu.memory_space<smem>>
      %c8_i32_121 = arith.constant 8 : i32
      %c0_i32_122 = arith.constant 0 : i32
      %173 = tpu.memref_slice %arg2[%172, %c0_i32_122] : memref<1000x128xf32, #tpu.memory_space<any>> -> memref<1x128xf32, #tpu.memory_space<any>>
      %c8_i32_123 = arith.constant 8 : i32
      %c0_i32_124 = arith.constant 0 : i32
      %174 = tpu.memref_slice %arg4[%104, %c8_i32_123, %c0_i32_124] : memref<2x16x128xf32, #tpu.memory_space<vmem>> -> memref<1x1x128xf32, #tpu.memory_space<vmem>>
      %175 = tpu.memref_squeeze %174 : memref<1x1x128xf32, #tpu.memory_space<vmem>> -> memref<1x128xf32, #tpu.memory_space<vmem>>
      %176 = tpu.memref_slice %arg5[%104, %c8_i32_121] : memref<2x16x!tpu.dma_semaphore, #tpu.memory_space<semaphore_mem>> -> memref<1x1x!tpu.dma_semaphore, #tpu.memory_space<semaphore_mem>>
      %177 = tpu.memref_squeeze %176 : memref<1x1x!tpu.dma_semaphore, #tpu.memory_space<semaphore_mem>> -> memref<!tpu.dma_semaphore, #tpu.memory_space<semaphore_mem>>
      tpu.enqueue_dma source(%173 : memref<1x128xf32, #tpu.memory_space<any>>) target(%175 : memref<1x128xf32, #tpu.memory_space<vmem>>) target_semaphore(%177 : memref<!tpu.dma_semaphore, #tpu.memory_space<semaphore_mem>>)
      %c9_i32_125 = arith.constant 9 : i32
      %178 = arith.addi %105, %c9_i32_125 : i32
      %179 = arith.index_cast %178 : i32 to index
      %180 = memref.load %arg1[%179] : memref<16xi32, #tpu.memory_space<smem>>
      %c9_i32_126 = arith.constant 9 : i32
      %c0_i32_127 = arith.constant 0 : i32
      %181 = tpu.memref_slice %arg2[%180, %c0_i32_127] : memref<1000x128xf32, #tpu.memory_space<any>> -> memref<1x128xf32, #tpu.memory_space<any>>
      %c9_i32_128 = arith.constant 9 : i32
      %c0_i32_129 = arith.constant 0 : i32
      %182 = tpu.memref_slice %arg4[%104, %c9_i32_128, %c0_i32_129] : memref<2x16x128xf32, #tpu.memory_space<vmem>> -> memref<1x1x128xf32, #tpu.memory_space<vmem>>
      %183 = tpu.memref_squeeze %182 : memref<1x1x128xf32, #tpu.memory_space<vmem>> -> memref<1x128xf32, #tpu.memory_space<vmem>>
      %184 = tpu.memref_slice %arg5[%104, %c9_i32_126] : memref<2x16x!tpu.dma_semaphore, #tpu.memory_space<semaphore_mem>> -> memref<1x1x!tpu.dma_semaphore, #tpu.memory_space<semaphore_mem>>
      %185 = tpu.memref_squeeze %184 : memref<1x1x!tpu.dma_semaphore, #tpu.memory_space<semaphore_mem>> -> memref<!tpu.dma_semaphore, #tpu.memory_space<semaphore_mem>>
      tpu.enqueue_dma source(%181 : memref<1x128xf32, #tpu.memory_space<any>>) target(%183 : memref<1x128xf32, #tpu.memory_space<vmem>>) target_semaphore(%185 : memref<!tpu.dma_semaphore, #tpu.memory_space<semaphore_mem>>)
      %c10_i32_130 = arith.constant 10 : i32
      %186 = arith.addi %105, %c10_i32_130 : i32
      %187 = arith.index_cast %186 : i32 to index
      %188 = memref.load %arg1[%187] : memref<16xi32, #tpu.memory_space<smem>>
      %c10_i32_131 = arith.constant 10 : i32
      %c0_i32_132 = arith.constant 0 : i32
      %189 = tpu.memref_slice %arg2[%188, %c0_i32_132] : memref<1000x128xf32, #tpu.memory_space<any>> -> memref<1x128xf32, #tpu.memory_space<any>>
      %c10_i32_133 = arith.constant 10 : i32
      %c0_i32_134 = arith.constant 0 : i32
      %190 = tpu.memref_slice %arg4[%104, %c10_i32_133, %c0_i32_134] : memref<2x16x128xf32, #tpu.memory_space<vmem>> -> memref<1x1x128xf32, #tpu.memory_space<vmem>>
      %191 = tpu.memref_squeeze %190 : memref<1x1x128xf32, #tpu.memory_space<vmem>> -> memref<1x128xf32, #tpu.memory_space<vmem>>
      %192 = tpu.memref_slice %arg5[%104, %c10_i32_131] : memref<2x16x!tpu.dma_semaphore, #tpu.memory_space<semaphore_mem>> -> memref<1x1x!tpu.dma_semaphore, #tpu.memory_space<semaphore_mem>>
      %193 = tpu.memref_squeeze %192 : memref<1x1x!tpu.dma_semaphore, #tpu.memory_space<semaphore_mem>> -> memref<!tpu.dma_semaphore, #tpu.memory_space<semaphore_mem>>
      tpu.enqueue_dma source(%189 : memref<1x128xf32, #tpu.memory_space<any>>) target(%191 : memref<1x128xf32, #tpu.memory_space<vmem>>) target_semaphore(%193 : memref<!tpu.dma_semaphore, #tpu.memory_space<semaphore_mem>>)
      %c11_i32_135 = arith.constant 11 : i32
      %194 = arith.addi %105, %c11_i32_135 : i32
      %195 = arith.index_cast %194 : i32 to index
      %196 = memref.load %arg1[%195] : memref<16xi32, #tpu.memory_space<smem>>
      %c11_i32_136 = arith.constant 11 : i32
      %c0_i32_137 = arith.constant 0 : i32
      %197 = tpu.memref_slice %arg2[%196, %c0_i32_137] : memref<1000x128xf32, #tpu.memory_space<any>> -> memref<1x128xf32, #tpu.memory_space<any>>
      %c11_i32_138 = arith.constant 11 : i32
      %c0_i32_139 = arith.constant 0 : i32
      %198 = tpu.memref_slice %arg4[%104, %c11_i32_138, %c0_i32_139] : memref<2x16x128xf32, #tpu.memory_space<vmem>> -> memref<1x1x128xf32, #tpu.memory_space<vmem>>
      %199 = tpu.memref_squeeze %198 : memref<1x1x128xf32, #tpu.memory_space<vmem>> -> memref<1x128xf32, #tpu.memory_space<vmem>>
      %200 = tpu.memref_slice %arg5[%104, %c11_i32_136] : memref<2x16x!tpu.dma_semaphore, #tpu.memory_space<semaphore_mem>> -> memref<1x1x!tpu.dma_semaphore, #tpu.memory_space<semaphore_mem>>
      %201 = tpu.memref_squeeze %200 : memref<1x1x!tpu.dma_semaphore, #tpu.memory_space<semaphore_mem>> -> memref<!tpu.dma_semaphore, #tpu.memory_space<semaphore_mem>>
      tpu.enqueue_dma source(%197 : memref<1x128xf32, #tpu.memory_space<any>>) target(%199 : memref<1x128xf32, #tpu.memory_space<vmem>>) target_semaphore(%201 : memref<!tpu.dma_semaphore, #tpu.memory_space<semaphore_mem>>)
      %c12_i32_140 = arith.constant 12 : i32
      %202 = arith.addi %105, %c12_i32_140 : i32
      %203 = arith.index_cast %202 : i32 to index
      %204 = memref.load %arg1[%203] : memref<16xi32, #tpu.memory_space<smem>>
      %c12_i32_141 = arith.constant 12 : i32
      %c0_i32_142 = arith.constant 0 : i32
      %205 = tpu.memref_slice %arg2[%204, %c0_i32_142] : memref<1000x128xf32, #tpu.memory_space<any>> -> memref<1x128xf32, #tpu.memory_space<any>>
      %c12_i32_143 = arith.constant 12 : i32
      %c0_i32_144 = arith.constant 0 : i32
      %206 = tpu.memref_slice %arg4[%104, %c12_i32_143, %c0_i32_144] : memref<2x16x128xf32, #tpu.memory_space<vmem>> -> memref<1x1x128xf32, #tpu.memory_space<vmem>>
      %207 = tpu.memref_squeeze %206 : memref<1x1x128xf32, #tpu.memory_space<vmem>> -> memref<1x128xf32, #tpu.memory_space<vmem>>
      %208 = tpu.memref_slice %arg5[%104, %c12_i32_141] : memref<2x16x!tpu.dma_semaphore, #tpu.memory_space<semaphore_mem>> -> memref<1x1x!tpu.dma_semaphore, #tpu.memory_space<semaphore_mem>>
      %209 = tpu.memref_squeeze %208 : memref<1x1x!tpu.dma_semaphore, #tpu.memory_space<semaphore_mem>> -> memref<!tpu.dma_semaphore, #tpu.memory_space<semaphore_mem>>
      tpu.enqueue_dma source(%205 : memref<1x128xf32, #tpu.memory_space<any>>) target(%207 : memref<1x128xf32, #tpu.memory_space<vmem>>) target_semaphore(%209 : memref<!tpu.dma_semaphore, #tpu.memory_space<semaphore_mem>>)
      %c13_i32_145 = arith.constant 13 : i32
      %210 = arith.addi %105, %c13_i32_145 : i32
      %211 = arith.index_cast %210 : i32 to index
      %212 = memref.load %arg1[%211] : memref<16xi32, #tpu.memory_space<smem>>
      %c13_i32_146 = arith.constant 13 : i32
      %c0_i32_147 = arith.constant 0 : i32
      %213 = tpu.memref_slice %arg2[%212, %c0_i32_147] : memref<1000x128xf32, #tpu.memory_space<any>> -> memref<1x128xf32, #tpu.memory_space<any>>
      %c13_i32_148 = arith.constant 13 : i32
      %c0_i32_149 = arith.constant 0 : i32
      %214 = tpu.memref_slice %arg4[%104, %c13_i32_148, %c0_i32_149] : memref<2x16x128xf32, #tpu.memory_space<vmem>> -> memref<1x1x128xf32, #tpu.memory_space<vmem>>
      %215 = tpu.memref_squeeze %214 : memref<1x1x128xf32, #tpu.memory_space<vmem>> -> memref<1x128xf32, #tpu.memory_space<vmem>>
      %216 = tpu.memref_slice %arg5[%104, %c13_i32_146] : memref<2x16x!tpu.dma_semaphore, #tpu.memory_space<semaphore_mem>> -> memref<1x1x!tpu.dma_semaphore, #tpu.memory_space<semaphore_mem>>
      %217 = tpu.memref_squeeze %216 : memref<1x1x!tpu.dma_semaphore, #tpu.memory_space<semaphore_mem>> -> memref<!tpu.dma_semaphore, #tpu.memory_space<semaphore_mem>>
      tpu.enqueue_dma source(%213 : memref<1x128xf32, #tpu.memory_space<any>>) target(%215 : memref<1x128xf32, #tpu.memory_space<vmem>>) target_semaphore(%217 : memref<!tpu.dma_semaphore, #tpu.memory_space<semaphore_mem>>)
      %c14_i32_150 = arith.constant 14 : i32
      %218 = arith.addi %105, %c14_i32_150 : i32
      %219 = arith.index_cast %218 : i32 to index
      %220 = memref.load %arg1[%219] : memref<16xi32, #tpu.memory_space<smem>>
      %c14_i32_151 = arith.constant 14 : i32
      %c0_i32_152 = arith.constant 0 : i32
      %221 = tpu.memref_slice %arg2[%220, %c0_i32_152] : memref<1000x128xf32, #tpu.memory_space<any>> -> memref<1x128xf32, #tpu.memory_space<any>>
      %c14_i32_153 = arith.constant 14 : i32
      %c0_i32_154 = arith.constant 0 : i32
      %222 = tpu.memref_slice %arg4[%104, %c14_i32_153, %c0_i32_154] : memref<2x16x128xf32, #tpu.memory_space<vmem>> -> memref<1x1x128xf32, #tpu.memory_space<vmem>>
      %223 = tpu.memref_squeeze %222 : memref<1x1x128xf32, #tpu.memory_space<vmem>> -> memref<1x128xf32, #tpu.memory_space<vmem>>
      %224 = tpu.memref_slice %arg5[%104, %c14_i32_151] : memref<2x16x!tpu.dma_semaphore, #tpu.memory_space<semaphore_mem>> -> memref<1x1x!tpu.dma_semaphore, #tpu.memory_space<semaphore_mem>>
      %225 = tpu.memref_squeeze %224 : memref<1x1x!tpu.dma_semaphore, #tpu.memory_space<semaphore_mem>> -> memref<!tpu.dma_semaphore, #tpu.memory_space<semaphore_mem>>
      tpu.enqueue_dma source(%221 : memref<1x128xf32, #tpu.memory_space<any>>) target(%223 : memref<1x128xf32, #tpu.memory_space<vmem>>) target_semaphore(%225 : memref<!tpu.dma_semaphore, #tpu.memory_space<semaphore_mem>>)
      %c15_i32_155 = arith.constant 15 : i32
      %226 = arith.addi %105, %c15_i32_155 : i32
      %227 = arith.index_cast %226 : i32 to index
      %228 = memref.load %arg1[%227] : memref<16xi32, #tpu.memory_space<smem>>
      %c15_i32_156 = arith.constant 15 : i32
      %c0_i32_157 = arith.constant 0 : i32
      %229 = tpu.memref_slice %arg2[%228, %c0_i32_157] : memref<1000x128xf32, #tpu.memory_space<any>> -> memref<1x128xf32, #tpu.memory_space<any>>
      %c15_i32_158 = arith.constant 15 : i32
      %c0_i32_159 = arith.constant 0 : i32
      %230 = tpu.memref_slice %arg4[%104, %c15_i32_158, %c0_i32_159] : memref<2x16x128xf32, #tpu.memory_space<vmem>> -> memref<1x1x128xf32, #tpu.memory_space<vmem>>
      %231 = tpu.memref_squeeze %230 : memref<1x1x128xf32, #tpu.memory_space<vmem>> -> memref<1x128xf32, #tpu.memory_space<vmem>>
      %232 = tpu.memref_slice %arg5[%104, %c15_i32_156] : memref<2x16x!tpu.dma_semaphore, #tpu.memory_space<semaphore_mem>> -> memref<1x1x!tpu.dma_semaphore, #tpu.memory_space<semaphore_mem>>
      %233 = tpu.memref_squeeze %232 : memref<1x1x!tpu.dma_semaphore, #tpu.memory_space<semaphore_mem>> -> memref<!tpu.dma_semaphore, #tpu.memory_space<semaphore_mem>>
      tpu.enqueue_dma source(%229 : memref<1x128xf32, #tpu.memory_space<any>>) target(%231 : memref<1x128xf32, #tpu.memory_space<vmem>>) target_semaphore(%233 : memref<!tpu.dma_semaphore, #tpu.memory_space<semaphore_mem>>)
    } else {
    }
    %c0_i32_8 = arith.constant 0 : i32
    %c0_i32_9 = arith.constant 0 : i32
    %c0_i32_10 = arith.constant 0 : i32
    %17 = tpu.memref_slice %arg2[%c0_i32_9, %c0_i32_10] : memref<1000x128xf32, #tpu.memory_space<any>> -> memref<1x128xf32, #tpu.memory_space<any>>
    %c0_i32_11 = arith.constant 0 : i32
    %c0_i32_12 = arith.constant 0 : i32
    %18 = tpu.memref_slice %arg4[%9, %c0_i32_11, %c0_i32_12] : memref<2x16x128xf32, #tpu.memory_space<vmem>> -> memref<1x1x128xf32, #tpu.memory_space<vmem>>
    %19 = tpu.memref_squeeze %18 : memref<1x1x128xf32, #tpu.memory_space<vmem>> -> memref<1x128xf32, #tpu.memory_space<vmem>>
    %20 = tpu.memref_slice %arg5[%9, %c0_i32_8] : memref<2x16x!tpu.dma_semaphore, #tpu.memory_space<semaphore_mem>> -> memref<1x1x!tpu.dma_semaphore, #tpu.memory_space<semaphore_mem>>
    %21 = tpu.memref_squeeze %20 : memref<1x1x!tpu.dma_semaphore, #tpu.memory_space<semaphore_mem>> -> memref<!tpu.dma_semaphore, #tpu.memory_space<semaphore_mem>>
    tpu.wait_dma2 semaphore(%21 : memref<!tpu.dma_semaphore, #tpu.memory_space<semaphore_mem>>) src(%17 : memref<1x128xf32, #tpu.memory_space<any>>) dst(%19 : memref<1x128xf32, #tpu.memory_space<vmem>>)
    %c1_i32_13 = arith.constant 1 : i32
    %c0_i32_14 = arith.constant 0 : i32
    %c0_i32_15 = arith.constant 0 : i32
    %22 = tpu.memref_slice %arg2[%c0_i32_14, %c0_i32_15] : memref<1000x128xf32, #tpu.memory_space<any>> -> memref<1x128xf32, #tpu.memory_space<any>>
    %c1_i32_16 = arith.constant 1 : i32
    %c0_i32_17 = arith.constant 0 : i32
    %23 = tpu.memref_slice %arg4[%9, %c1_i32_16, %c0_i32_17] : memref<2x16x128xf32, #tpu.memory_space<vmem>> -> memref<1x1x128xf32, #tpu.memory_space<vmem>>
    %24 = tpu.memref_squeeze %23 : memref<1x1x128xf32, #tpu.memory_space<vmem>> -> memref<1x128xf32, #tpu.memory_space<vmem>>
    %25 = tpu.memref_slice %arg5[%9, %c1_i32_13] : memref<2x16x!tpu.dma_semaphore, #tpu.memory_space<semaphore_mem>> -> memref<1x1x!tpu.dma_semaphore, #tpu.memory_space<semaphore_mem>>
    %26 = tpu.memref_squeeze %25 : memref<1x1x!tpu.dma_semaphore, #tpu.memory_space<semaphore_mem>> -> memref<!tpu.dma_semaphore, #tpu.memory_space<semaphore_mem>>
    tpu.wait_dma2 semaphore(%26 : memref<!tpu.dma_semaphore, #tpu.memory_space<semaphore_mem>>) src(%22 : memref<1x128xf32, #tpu.memory_space<any>>) dst(%24 : memref<1x128xf32, #tpu.memory_space<vmem>>)
    %c2_i32_18 = arith.constant 2 : i32
    %c0_i32_19 = arith.constant 0 : i32
    %c0_i32_20 = arith.constant 0 : i32
    %27 = tpu.memref_slice %arg2[%c0_i32_19, %c0_i32_20] : memref<1000x128xf32, #tpu.memory_space<any>> -> memref<1x128xf32, #tpu.memory_space<any>>
    %c2_i32_21 = arith.constant 2 : i32
    %c0_i32_22 = arith.constant 0 : i32
    %28 = tpu.memref_slice %arg4[%9, %c2_i32_21, %c0_i32_22] : memref<2x16x128xf32, #tpu.memory_space<vmem>> -> memref<1x1x128xf32, #tpu.memory_space<vmem>>
    %29 = tpu.memref_squeeze %28 : memref<1x1x128xf32, #tpu.memory_space<vmem>> -> memref<1x128xf32, #tpu.memory_space<vmem>>
    %30 = tpu.memref_slice %arg5[%9, %c2_i32_18] : memref<2x16x!tpu.dma_semaphore, #tpu.memory_space<semaphore_mem>> -> memref<1x1x!tpu.dma_semaphore, #tpu.memory_space<semaphore_mem>>
    %31 = tpu.memref_squeeze %30 : memref<1x1x!tpu.dma_semaphore, #tpu.memory_space<semaphore_mem>> -> memref<!tpu.dma_semaphore, #tpu.memory_space<semaphore_mem>>
    tpu.wait_dma2 semaphore(%31 : memref<!tpu.dma_semaphore, #tpu.memory_space<semaphore_mem>>) src(%27 : memref<1x128xf32, #tpu.memory_space<any>>) dst(%29 : memref<1x128xf32, #tpu.memory_space<vmem>>)
    %c3_i32 = arith.constant 3 : i32
    %c0_i32_23 = arith.constant 0 : i32
    %c0_i32_24 = arith.constant 0 : i32
    %32 = tpu.memref_slice %arg2[%c0_i32_23, %c0_i32_24] : memref<1000x128xf32, #tpu.memory_space<any>> -> memref<1x128xf32, #tpu.memory_space<any>>
    %c3_i32_25 = arith.constant 3 : i32
    %c0_i32_26 = arith.constant 0 : i32
    %33 = tpu.memref_slice %arg4[%9, %c3_i32_25, %c0_i32_26] : memref<2x16x128xf32, #tpu.memory_space<vmem>> -> memref<1x1x128xf32, #tpu.memory_space<vmem>>
    %34 = tpu.memref_squeeze %33 : memref<1x1x128xf32, #tpu.memory_space<vmem>> -> memref<1x128xf32, #tpu.memory_space<vmem>>
    %35 = tpu.memref_slice %arg5[%9, %c3_i32] : memref<2x16x!tpu.dma_semaphore, #tpu.memory_space<semaphore_mem>> -> memref<1x1x!tpu.dma_semaphore, #tpu.memory_space<semaphore_mem>>
    %36 = tpu.memref_squeeze %35 : memref<1x1x!tpu.dma_semaphore, #tpu.memory_space<semaphore_mem>> -> memref<!tpu.dma_semaphore, #tpu.memory_space<semaphore_mem>>
    tpu.wait_dma2 semaphore(%36 : memref<!tpu.dma_semaphore, #tpu.memory_space<semaphore_mem>>) src(%32 : memref<1x128xf32, #tpu.memory_space<any>>) dst(%34 : memref<1x128xf32, #tpu.memory_space<vmem>>)
    %c4_i32 = arith.constant 4 : i32
    %c0_i32_27 = arith.constant 0 : i32
    %c0_i32_28 = arith.constant 0 : i32
    %37 = tpu.memref_slice %arg2[%c0_i32_27, %c0_i32_28] : memref<1000x128xf32, #tpu.memory_space<any>> -> memref<1x128xf32, #tpu.memory_space<any>>
    %c4_i32_29 = arith.constant 4 : i32
    %c0_i32_30 = arith.constant 0 : i32
    %38 = tpu.memref_slice %arg4[%9, %c4_i32_29, %c0_i32_30] : memref<2x16x128xf32, #tpu.memory_space<vmem>> -> memref<1x1x128xf32, #tpu.memory_space<vmem>>
    %39 = tpu.memref_squeeze %38 : memref<1x1x128xf32, #tpu.memory_space<vmem>> -> memref<1x128xf32, #tpu.memory_space<vmem>>
    %40 = tpu.memref_slice %arg5[%9, %c4_i32] : memref<2x16x!tpu.dma_semaphore, #tpu.memory_space<semaphore_mem>> -> memref<1x1x!tpu.dma_semaphore, #tpu.memory_space<semaphore_mem>>
    %41 = tpu.memref_squeeze %40 : memref<1x1x!tpu.dma_semaphore, #tpu.memory_space<semaphore_mem>> -> memref<!tpu.dma_semaphore, #tpu.memory_space<semaphore_mem>>
    tpu.wait_dma2 semaphore(%41 : memref<!tpu.dma_semaphore, #tpu.memory_space<semaphore_mem>>) src(%37 : memref<1x128xf32, #tpu.memory_space<any>>) dst(%39 : memref<1x128xf32, #tpu.memory_space<vmem>>)
    %c5_i32 = arith.constant 5 : i32
    %c0_i32_31 = arith.constant 0 : i32
    %c0_i32_32 = arith.constant 0 : i32
    %42 = tpu.memref_slice %arg2[%c0_i32_31, %c0_i32_32] : memref<1000x128xf32, #tpu.memory_space<any>> -> memref<1x128xf32, #tpu.memory_space<any>>
    %c5_i32_33 = arith.constant 5 : i32
    %c0_i32_34 = arith.constant 0 : i32
    %43 = tpu.memref_slice %arg4[%9, %c5_i32_33, %c0_i32_34] : memref<2x16x128xf32, #tpu.memory_space<vmem>> -> memref<1x1x128xf32, #tpu.memory_space<vmem>>
    %44 = tpu.memref_squeeze %43 : memref<1x1x128xf32, #tpu.memory_space<vmem>> -> memref<1x128xf32, #tpu.memory_space<vmem>>
    %45 = tpu.memref_slice %arg5[%9, %c5_i32] : memref<2x16x!tpu.dma_semaphore, #tpu.memory_space<semaphore_mem>> -> memref<1x1x!tpu.dma_semaphore, #tpu.memory_space<semaphore_mem>>
    %46 = tpu.memref_squeeze %45 : memref<1x1x!tpu.dma_semaphore, #tpu.memory_space<semaphore_mem>> -> memref<!tpu.dma_semaphore, #tpu.memory_space<semaphore_mem>>
    tpu.wait_dma2 semaphore(%46 : memref<!tpu.dma_semaphore, #tpu.memory_space<semaphore_mem>>) src(%42 : memref<1x128xf32, #tpu.memory_space<any>>) dst(%44 : memref<1x128xf32, #tpu.memory_space<vmem>>)
    %c6_i32 = arith.constant 6 : i32
    %c0_i32_35 = arith.constant 0 : i32
    %c0_i32_36 = arith.constant 0 : i32
    %47 = tpu.memref_slice %arg2[%c0_i32_35, %c0_i32_36] : memref<1000x128xf32, #tpu.memory_space<any>> -> memref<1x128xf32, #tpu.memory_space<any>>
    %c6_i32_37 = arith.constant 6 : i32
    %c0_i32_38 = arith.constant 0 : i32
    %48 = tpu.memref_slice %arg4[%9, %c6_i32_37, %c0_i32_38] : memref<2x16x128xf32, #tpu.memory_space<vmem>> -> memref<1x1x128xf32, #tpu.memory_space<vmem>>
    %49 = tpu.memref_squeeze %48 : memref<1x1x128xf32, #tpu.memory_space<vmem>> -> memref<1x128xf32, #tpu.memory_space<vmem>>
    %50 = tpu.memref_slice %arg5[%9, %c6_i32] : memref<2x16x!tpu.dma_semaphore, #tpu.memory_space<semaphore_mem>> -> memref<1x1x!tpu.dma_semaphore, #tpu.memory_space<semaphore_mem>>
    %51 = tpu.memref_squeeze %50 : memref<1x1x!tpu.dma_semaphore, #tpu.memory_space<semaphore_mem>> -> memref<!tpu.dma_semaphore, #tpu.memory_space<semaphore_mem>>
    tpu.wait_dma2 semaphore(%51 : memref<!tpu.dma_semaphore, #tpu.memory_space<semaphore_mem>>) src(%47 : memref<1x128xf32, #tpu.memory_space<any>>) dst(%49 : memref<1x128xf32, #tpu.memory_space<vmem>>)
    %c7_i32 = arith.constant 7 : i32
    %c0_i32_39 = arith.constant 0 : i32
    %c0_i32_40 = arith.constant 0 : i32
    %52 = tpu.memref_slice %arg2[%c0_i32_39, %c0_i32_40] : memref<1000x128xf32, #tpu.memory_space<any>> -> memref<1x128xf32, #tpu.memory_space<any>>
    %c7_i32_41 = arith.constant 7 : i32
    %c0_i32_42 = arith.constant 0 : i32
    %53 = tpu.memref_slice %arg4[%9, %c7_i32_41, %c0_i32_42] : memref<2x16x128xf32, #tpu.memory_space<vmem>> -> memref<1x1x128xf32, #tpu.memory_space<vmem>>
    %54 = tpu.memref_squeeze %53 : memref<1x1x128xf32, #tpu.memory_space<vmem>> -> memref<1x128xf32, #tpu.memory_space<vmem>>
    %55 = tpu.memref_slice %arg5[%9, %c7_i32] : memref<2x16x!tpu.dma_semaphore, #tpu.memory_space<semaphore_mem>> -> memref<1x1x!tpu.dma_semaphore, #tpu.memory_space<semaphore_mem>>
    %56 = tpu.memref_squeeze %55 : memref<1x1x!tpu.dma_semaphore, #tpu.memory_space<semaphore_mem>> -> memref<!tpu.dma_semaphore, #tpu.memory_space<semaphore_mem>>
    tpu.wait_dma2 semaphore(%56 : memref<!tpu.dma_semaphore, #tpu.memory_space<semaphore_mem>>) src(%52 : memref<1x128xf32, #tpu.memory_space<any>>) dst(%54 : memref<1x128xf32, #tpu.memory_space<vmem>>)
    %c8_i32 = arith.constant 8 : i32
    %c0_i32_43 = arith.constant 0 : i32
    %c0_i32_44 = arith.constant 0 : i32
    %57 = tpu.memref_slice %arg2[%c0_i32_43, %c0_i32_44] : memref<1000x128xf32, #tpu.memory_space<any>> -> memref<1x128xf32, #tpu.memory_space<any>>
    %c8_i32_45 = arith.constant 8 : i32
    %c0_i32_46 = arith.constant 0 : i32
    %58 = tpu.memref_slice %arg4[%9, %c8_i32_45, %c0_i32_46] : memref<2x16x128xf32, #tpu.memory_space<vmem>> -> memref<1x1x128xf32, #tpu.memory_space<vmem>>
    %59 = tpu.memref_squeeze %58 : memref<1x1x128xf32, #tpu.memory_space<vmem>> -> memref<1x128xf32, #tpu.memory_space<vmem>>
    %60 = tpu.memref_slice %arg5[%9, %c8_i32] : memref<2x16x!tpu.dma_semaphore, #tpu.memory_space<semaphore_mem>> -> memref<1x1x!tpu.dma_semaphore, #tpu.memory_space<semaphore_mem>>
    %61 = tpu.memref_squeeze %60 : memref<1x1x!tpu.dma_semaphore, #tpu.memory_space<semaphore_mem>> -> memref<!tpu.dma_semaphore, #tpu.memory_space<semaphore_mem>>
    tpu.wait_dma2 semaphore(%61 : memref<!tpu.dma_semaphore, #tpu.memory_space<semaphore_mem>>) src(%57 : memref<1x128xf32, #tpu.memory_space<any>>) dst(%59 : memref<1x128xf32, #tpu.memory_space<vmem>>)
    %c9_i32 = arith.constant 9 : i32
    %c0_i32_47 = arith.constant 0 : i32
    %c0_i32_48 = arith.constant 0 : i32
    %62 = tpu.memref_slice %arg2[%c0_i32_47, %c0_i32_48] : memref<1000x128xf32, #tpu.memory_space<any>> -> memref<1x128xf32, #tpu.memory_space<any>>
    %c9_i32_49 = arith.constant 9 : i32
    %c0_i32_50 = arith.constant 0 : i32
    %63 = tpu.memref_slice %arg4[%9, %c9_i32_49, %c0_i32_50] : memref<2x16x128xf32, #tpu.memory_space<vmem>> -> memref<1x1x128xf32, #tpu.memory_space<vmem>>
    %64 = tpu.memref_squeeze %63 : memref<1x1x128xf32, #tpu.memory_space<vmem>> -> memref<1x128xf32, #tpu.memory_space<vmem>>
    %65 = tpu.memref_slice %arg5[%9, %c9_i32] : memref<2x16x!tpu.dma_semaphore, #tpu.memory_space<semaphore_mem>> -> memref<1x1x!tpu.dma_semaphore, #tpu.memory_space<semaphore_mem>>
    %66 = tpu.memref_squeeze %65 : memref<1x1x!tpu.dma_semaphore, #tpu.memory_space<semaphore_mem>> -> memref<!tpu.dma_semaphore, #tpu.memory_space<semaphore_mem>>
    tpu.wait_dma2 semaphore(%66 : memref<!tpu.dma_semaphore, #tpu.memory_space<semaphore_mem>>) src(%62 : memref<1x128xf32, #tpu.memory_space<any>>) dst(%64 : memref<1x128xf32, #tpu.memory_space<vmem>>)
    %c10_i32 = arith.constant 10 : i32
    %c0_i32_51 = arith.constant 0 : i32
    %c0_i32_52 = arith.constant 0 : i32
    %67 = tpu.memref_slice %arg2[%c0_i32_51, %c0_i32_52] : memref<1000x128xf32, #tpu.memory_space<any>> -> memref<1x128xf32, #tpu.memory_space<any>>
    %c10_i32_53 = arith.constant 10 : i32
    %c0_i32_54 = arith.constant 0 : i32
    %68 = tpu.memref_slice %arg4[%9, %c10_i32_53, %c0_i32_54] : memref<2x16x128xf32, #tpu.memory_space<vmem>> -> memref<1x1x128xf32, #tpu.memory_space<vmem>>
    %69 = tpu.memref_squeeze %68 : memref<1x1x128xf32, #tpu.memory_space<vmem>> -> memref<1x128xf32, #tpu.memory_space<vmem>>
    %70 = tpu.memref_slice %arg5[%9, %c10_i32] : memref<2x16x!tpu.dma_semaphore, #tpu.memory_space<semaphore_mem>> -> memref<1x1x!tpu.dma_semaphore, #tpu.memory_space<semaphore_mem>>
    %71 = tpu.memref_squeeze %70 : memref<1x1x!tpu.dma_semaphore, #tpu.memory_space<semaphore_mem>> -> memref<!tpu.dma_semaphore, #tpu.memory_space<semaphore_mem>>
    tpu.wait_dma2 semaphore(%71 : memref<!tpu.dma_semaphore, #tpu.memory_space<semaphore_mem>>) src(%67 : memref<1x128xf32, #tpu.memory_space<any>>) dst(%69 : memref<1x128xf32, #tpu.memory_space<vmem>>)
    %c11_i32 = arith.constant 11 : i32
    %c0_i32_55 = arith.constant 0 : i32
    %c0_i32_56 = arith.constant 0 : i32
    %72 = tpu.memref_slice %arg2[%c0_i32_55, %c0_i32_56] : memref<1000x128xf32, #tpu.memory_space<any>> -> memref<1x128xf32, #tpu.memory_space<any>>
    %c11_i32_57 = arith.constant 11 : i32
    %c0_i32_58 = arith.constant 0 : i32
    %73 = tpu.memref_slice %arg4[%9, %c11_i32_57, %c0_i32_58] : memref<2x16x128xf32, #tpu.memory_space<vmem>> -> memref<1x1x128xf32, #tpu.memory_space<vmem>>
    %74 = tpu.memref_squeeze %73 : memref<1x1x128xf32, #tpu.memory_space<vmem>> -> memref<1x128xf32, #tpu.memory_space<vmem>>
    %75 = tpu.memref_slice %arg5[%9, %c11_i32] : memref<2x16x!tpu.dma_semaphore, #tpu.memory_space<semaphore_mem>> -> memref<1x1x!tpu.dma_semaphore, #tpu.memory_space<semaphore_mem>>
    %76 = tpu.memref_squeeze %75 : memref<1x1x!tpu.dma_semaphore, #tpu.memory_space<semaphore_mem>> -> memref<!tpu.dma_semaphore, #tpu.memory_space<semaphore_mem>>
    tpu.wait_dma2 semaphore(%76 : memref<!tpu.dma_semaphore, #tpu.memory_space<semaphore_mem>>) src(%72 : memref<1x128xf32, #tpu.memory_space<any>>) dst(%74 : memref<1x128xf32, #tpu.memory_space<vmem>>)
    %c12_i32 = arith.constant 12 : i32
    %c0_i32_59 = arith.constant 0 : i32
    %c0_i32_60 = arith.constant 0 : i32
    %77 = tpu.memref_slice %arg2[%c0_i32_59, %c0_i32_60] : memref<1000x128xf32, #tpu.memory_space<any>> -> memref<1x128xf32, #tpu.memory_space<any>>
    %c12_i32_61 = arith.constant 12 : i32
    %c0_i32_62 = arith.constant 0 : i32
    %78 = tpu.memref_slice %arg4[%9, %c12_i32_61, %c0_i32_62] : memref<2x16x128xf32, #tpu.memory_space<vmem>> -> memref<1x1x128xf32, #tpu.memory_space<vmem>>
    %79 = tpu.memref_squeeze %78 : memref<1x1x128xf32, #tpu.memory_space<vmem>> -> memref<1x128xf32, #tpu.memory_space<vmem>>
    %80 = tpu.memref_slice %arg5[%9, %c12_i32] : memref<2x16x!tpu.dma_semaphore, #tpu.memory_space<semaphore_mem>> -> memref<1x1x!tpu.dma_semaphore, #tpu.memory_space<semaphore_mem>>
    %81 = tpu.memref_squeeze %80 : memref<1x1x!tpu.dma_semaphore, #tpu.memory_space<semaphore_mem>> -> memref<!tpu.dma_semaphore, #tpu.memory_space<semaphore_mem>>
    tpu.wait_dma2 semaphore(%81 : memref<!tpu.dma_semaphore, #tpu.memory_space<semaphore_mem>>) src(%77 : memref<1x128xf32, #tpu.memory_space<any>>) dst(%79 : memref<1x128xf32, #tpu.memory_space<vmem>>)
    %c13_i32 = arith.constant 13 : i32
    %c0_i32_63 = arith.constant 0 : i32
    %c0_i32_64 = arith.constant 0 : i32
    %82 = tpu.memref_slice %arg2[%c0_i32_63, %c0_i32_64] : memref<1000x128xf32, #tpu.memory_space<any>> -> memref<1x128xf32, #tpu.memory_space<any>>
    %c13_i32_65 = arith.constant 13 : i32
    %c0_i32_66 = arith.constant 0 : i32
    %83 = tpu.memref_slice %arg4[%9, %c13_i32_65, %c0_i32_66] : memref<2x16x128xf32, #tpu.memory_space<vmem>> -> memref<1x1x128xf32, #tpu.memory_space<vmem>>
    %84 = tpu.memref_squeeze %83 : memref<1x1x128xf32, #tpu.memory_space<vmem>> -> memref<1x128xf32, #tpu.memory_space<vmem>>
    %85 = tpu.memref_slice %arg5[%9, %c13_i32] : memref<2x16x!tpu.dma_semaphore, #tpu.memory_space<semaphore_mem>> -> memref<1x1x!tpu.dma_semaphore, #tpu.memory_space<semaphore_mem>>
    %86 = tpu.memref_squeeze %85 : memref<1x1x!tpu.dma_semaphore, #tpu.memory_space<semaphore_mem>> -> memref<!tpu.dma_semaphore, #tpu.memory_space<semaphore_mem>>
    tpu.wait_dma2 semaphore(%86 : memref<!tpu.dma_semaphore, #tpu.memory_space<semaphore_mem>>) src(%82 : memref<1x128xf32, #tpu.memory_space<any>>) dst(%84 : memref<1x128xf32, #tpu.memory_space<vmem>>)
    %c14_i32 = arith.constant 14 : i32
    %c0_i32_67 = arith.constant 0 : i32
    %c0_i32_68 = arith.constant 0 : i32
    %87 = tpu.memref_slice %arg2[%c0_i32_67, %c0_i32_68] : memref<1000x128xf32, #tpu.memory_space<any>> -> memref<1x128xf32, #tpu.memory_space<any>>
    %c14_i32_69 = arith.constant 14 : i32
    %c0_i32_70 = arith.constant 0 : i32
    %88 = tpu.memref_slice %arg4[%9, %c14_i32_69, %c0_i32_70] : memref<2x16x128xf32, #tpu.memory_space<vmem>> -> memref<1x1x128xf32, #tpu.memory_space<vmem>>
    %89 = tpu.memref_squeeze %88 : memref<1x1x128xf32, #tpu.memory_space<vmem>> -> memref<1x128xf32, #tpu.memory_space<vmem>>
    %90 = tpu.memref_slice %arg5[%9, %c14_i32] : memref<2x16x!tpu.dma_semaphore, #tpu.memory_space<semaphore_mem>> -> memref<1x1x!tpu.dma_semaphore, #tpu.memory_space<semaphore_mem>>
    %91 = tpu.memref_squeeze %90 : memref<1x1x!tpu.dma_semaphore, #tpu.memory_space<semaphore_mem>> -> memref<!tpu.dma_semaphore, #tpu.memory_space<semaphore_mem>>
    tpu.wait_dma2 semaphore(%91 : memref<!tpu.dma_semaphore, #tpu.memory_space<semaphore_mem>>) src(%87 : memref<1x128xf32, #tpu.memory_space<any>>) dst(%89 : memref<1x128xf32, #tpu.memory_space<vmem>>)
    %c15_i32 = arith.constant 15 : i32
    %c0_i32_71 = arith.constant 0 : i32
    %c0_i32_72 = arith.constant 0 : i32
    %92 = tpu.memref_slice %arg2[%c0_i32_71, %c0_i32_72] : memref<1000x128xf32, #tpu.memory_space<any>> -> memref<1x128xf32, #tpu.memory_space<any>>
    %c15_i32_73 = arith.constant 15 : i32
    %c0_i32_74 = arith.constant 0 : i32
    %93 = tpu.memref_slice %arg4[%9, %c15_i32_73, %c0_i32_74] : memref<2x16x128xf32, #tpu.memory_space<vmem>> -> memref<1x1x128xf32, #tpu.memory_space<vmem>>
    %94 = tpu.memref_squeeze %93 : memref<1x1x128xf32, #tpu.memory_space<vmem>> -> memref<1x128xf32, #tpu.memory_space<vmem>>
    %95 = tpu.memref_slice %arg5[%9, %c15_i32] : memref<2x16x!tpu.dma_semaphore, #tpu.memory_space<semaphore_mem>> -> memref<1x1x!tpu.dma_semaphore, #tpu.memory_space<semaphore_mem>>
    %96 = tpu.memref_squeeze %95 : memref<1x1x!tpu.dma_semaphore, #tpu.memory_space<semaphore_mem>> -> memref<!tpu.dma_semaphore, #tpu.memory_space<semaphore_mem>>
    tpu.wait_dma2 semaphore(%96 : memref<!tpu.dma_semaphore, #tpu.memory_space<semaphore_mem>>) src(%92 : memref<1x128xf32, #tpu.memory_space<any>>) dst(%94 : memref<1x128xf32, #tpu.memory_space<vmem>>)
    %97 = arith.index_cast %9 : i32 to index
    %c0 = arith.constant 0 : index
    %c0_75 = arith.constant 0 : index
    %98 = vector.load %arg4[%97, %c0, %c0_75] : memref<2x16x128xf32, #tpu.memory_space<vmem>>, vector<1x16x128xf32>
    %99 = vector.shape_cast %98 : vector<1x16x128xf32> to vector<16x128xf32>
    %cst = arith.constant 11.3137083 : f32
    %100 = vector.broadcast %cst : f32 to vector<16x128xf32>
    %101 = arith.mulf %99, %100 : vector<16x128xf32>
    %c0_76 = arith.constant 0 : index
    %c0_77 = arith.constant 0 : index
    %102 = vector.load %arg3[%c0_76, %c0_77] : memref<16x128xf32, #tpu.memory_space<vmem>>, vector<16x128xf32>
    tpu.vector_store %arg3[%c0_76, %c0_77], %101 {strides = array<i32>} : memref<16x128xf32, #tpu.memory_space<vmem>>, vector<16x128xf32>,
    return
  }
  func.func @transform_1(%arg0: i32, %arg1: memref<16xi32, #tpu.memory_space<smem>>) -> (i32, i32) {
    %c0_i32 = arith.constant 0 : i32
    %c0_i32_0 = arith.constant 0 : i32
    return %arg0, %c0_i32 : i32, i32
  }
}

</mosaic_0001>

<llo_original>
// kernel: tpu_custom_call.1
$region0: #{tpu_custom_call.1}
  #allocation0 [shape = 'u32[]', space=smem, size = 0x4, offset = 0x4, fixed_abs, tag = 'smem constant byte address 0x4 - core index']
  #allocation1 [shape = 'u32[144,128]{1,0:T(1,128)}', space=vmem, size = 0x12000, scoped, tag = 'internal scratch']
  #allocation2 [shape = 'f32[2,16,128]{2,1,0:T(8,128)}', space=vmem, size = 0x4000, scoped, tag = 'scratch operand']
  #allocation3 [shape = 's32[32]{0}', space=sflag, size = 0x80, scoped, tag = 'scratch operand']
  #allocation4 [shape = 's32[1]{0}', space=sflag, size = 0x4, scoped, tag = 'scoped memory for tpu_custom_call.1']
  #allocation5 [shape = 'u8[512]{0}', space=smem, size = 0x200, scoped, tag = 'prefetched SMEM operand 0']
  #allocation8 [shape = 's32[]', space=sflag, size = 0x4, offset = 0, fixed_abs, tag = 'sflag constant byte address 0x0 - dummy sync flag']
  #allocation9 [shape = 's32[]', space=sflag, size = 0x4, offset = 0, fixed_abs, tag = 'sflag constant byte address 0x0 - dummy sync flag']
  #allocation10 [shape = 'u32[]', space=smem, size = 0x4, offset = 0x44, fixed_abs, tag = 'smem constant byte address 0x44 - assertion arg 0']
  #allocation11 [shape = 'u32[]', space=smem, size = 0x4, offset = 0x48, fixed_abs, tag = 'smem constant byte address 0x48 - assertion arg 1']
  #allocation12 [shape = 's32[]', space=sflag, size = 0x4, offset = 0, fixed_abs, tag = 'sflag constant byte address 0x0 - dummy sync flag']
  #allocation13 [shape = 's32[]', space=sflag, size = 0x4, offset = 0, fixed_abs, tag = 'sflag constant byte address 0x0 - dummy sync flag']
  #allocation14 [shape = 's32[]', space=sflag, size = 0x4, offset = 0, fixed_abs, tag = 'sflag constant byte address 0x0 - dummy sync flag']
  #allocation15 [shape = 's32[]', space=sflag, size = 0x4, offset = 0, fixed_abs, tag = 'sflag constant byte address 0x0 - dummy sync flag']
  #allocation16 [shape = 's32[]', space=sflag, size = 0x4, offset = 0, fixed_abs, tag = 'sflag constant byte address 0x0 - dummy sync flag']
  #allocation17 [shape = 's32[]', space=sflag, size = 0x4, offset = 0, fixed_abs, tag = 'sflag constant byte address 0x0 - dummy sync flag']
  #allocation18 [shape = 's32[]', space=sflag, size = 0x4, offset = 0, fixed_abs, tag = 'sflag constant byte address 0x0 - dummy sync flag']
  #allocation19 [shape = 's32[]', space=sflag, size = 0x4, offset = 0, fixed_abs, tag = 'sflag constant byte address 0x0 - dummy sync flag']
  #allocation20 [shape = 's32[]', space=sflag, size = 0x4, offset = 0, fixed_abs, tag = 'sflag constant byte address 0x0 - dummy sync flag']
  #allocation21 [shape = 's32[]', space=sflag, size = 0x4, offset = 0, fixed_abs, tag = 'sflag constant byte address 0x0 - dummy sync flag']
  #allocation22 [shape = 's32[]', space=sflag, size = 0x4, offset = 0, fixed_abs, tag = 'sflag constant byte address 0x0 - dummy sync flag']
  #allocation23 [shape = 's32[]', space=sflag, size = 0x4, offset = 0, fixed_abs, tag = 'sflag constant byte address 0x0 - dummy sync flag']
  #allocation24 [shape = 's32[]', space=sflag, size = 0x4, offset = 0, fixed_abs, tag = 'sflag constant byte address 0x0 - dummy sync flag']
  #allocation25 [shape = 's32[]', space=sflag, size = 0x4, offset = 0, fixed_abs, tag = 'sflag constant byte address 0x0 - dummy sync flag']
  #allocation26 [shape = 's32[]', space=sflag, size = 0x4, offset = 0, fixed_abs, tag = 'sflag constant byte address 0x0 - dummy sync flag']
  #allocation27 [shape = 's32[]', space=sflag, size = 0x4, offset = 0, fixed_abs, tag = 'sflag constant byte address 0x0 - dummy sync flag']
  #allocation28 [shape = 's32[]', space=sflag, size = 0x4, offset = 0, fixed_abs, tag = 'sflag constant byte address 0x0 - dummy sync flag']
  #allocation29 [shape = 's32[]', space=sflag, size = 0x4, offset = 0, fixed_abs, tag = 'sflag constant byte address 0x0 - dummy sync flag']
  #allocation30 [shape = 's32[]', space=sflag, size = 0x4, offset = 0, fixed_abs, tag = 'sflag constant byte address 0x0 - dummy sync flag']
  #allocation31 [shape = 's32[]', space=sflag, size = 0x4, offset = 0, fixed_abs, tag = 'sflag constant byte address 0x0 - dummy sync flag']
  #allocation32 [shape = 's32[]', space=sflag, size = 0x4, offset = 0, fixed_abs, tag = 'sflag constant byte address 0x0 - dummy sync flag']
  #allocation33 [shape = 's32[]', space=sflag, size = 0x4, offset = 0, fixed_abs, tag = 'sflag constant byte address 0x0 - dummy sync flag']
  #allocation34 [shape = 's32[]', space=sflag, size = 0x4, offset = 0, fixed_abs, tag = 'sflag constant byte address 0x0 - dummy sync flag']
  #allocation35 [shape = 's32[]', space=sflag, size = 0x4, offset = 0, fixed_abs, tag = 'sflag constant byte address 0x0 - dummy sync flag']
  #allocation36 [shape = 's32[]', space=sflag, size = 0x4, offset = 0, fixed_abs, tag = 'sflag constant byte address 0x0 - dummy sync flag']
  #allocation37 [shape = 's32[]', space=sflag, size = 0x4, offset = 0, fixed_abs, tag = 'sflag constant byte address 0x0 - dummy sync flag']
  #allocation38 [shape = 's32[]', space=sflag, size = 0x4, offset = 0, fixed_abs, tag = 'sflag constant byte address 0x0 - dummy sync flag']
  #allocation39 [shape = 's32[]', space=sflag, size = 0x4, offset = 0, fixed_abs, tag = 'sflag constant byte address 0x0 - dummy sync flag']
  #allocation40 [shape = 's32[]', space=sflag, size = 0x4, offset = 0, fixed_abs, tag = 'sflag constant byte address 0x0 - dummy sync flag']
  #allocation41 [shape = 's32[]', space=sflag, size = 0x4, offset = 0, fixed_abs, tag = 'sflag constant byte address 0x0 - dummy sync flag']
  #allocation42 [shape = 's32[]', space=sflag, size = 0x4, offset = 0, fixed_abs, tag = 'sflag constant byte address 0x0 - dummy sync flag']
  #allocation43 [shape = 's32[]', space=sflag, size = 0x4, offset = 0, fixed_abs, tag = 'sflag constant byte address 0x0 - dummy sync flag']
  #allocation44 [shape = 's32[]', space=sflag, size = 0x4, offset = 0, fixed_abs, tag = 'sflag constant byte address 0x0 - dummy sync flag']
  #allocation45 [shape = 's32[]', space=sflag, size = 0x4, offset = 0, fixed_abs, tag = 'sflag constant byte address 0x0 - dummy sync flag']
  #allocation46 [shape = 's32[]', space=sflag, size = 0x4, offset = 0, fixed_abs, tag = 'sflag constant byte address 0x0 - dummy sync flag']
  #allocation47 [shape = 's32[]', space=sflag, size = 0x4, offset = 0, fixed_abs, tag = 'sflag constant byte address 0x0 - dummy sync flag']
  #allocation48 [shape = 's32[]', space=sflag, size = 0x4, offset = 0, fixed_abs, tag = 'sflag constant byte address 0x0 - dummy sync flag']
  #allocation49 [shape = 's32[]', space=sflag, size = 0x4, offset = 0, fixed_abs, tag = 'sflag constant byte address 0x0 - dummy sync flag']
  #allocation50 [shape = 's32[]', space=sflag, size = 0x4, offset = 0, fixed_abs, tag = 'sflag constant byte address 0x0 - dummy sync flag']
  #allocation51 [shape = 's32[]', space=sflag, size = 0x4, offset = 0, fixed_abs, tag = 'sflag constant byte address 0x0 - dummy sync flag']
  #allocation52 [shape = 's32[]', space=sflag, size = 0x4, offset = 0, fixed_abs, tag = 'sflag constant byte address 0x0 - dummy sync flag']
  #allocation53 [shape = 's32[]', space=sflag, size = 0x4, offset = 0, fixed_abs, tag = 'sflag constant byte address 0x0 - dummy sync flag']
  #allocation54 [shape = 's32[]', space=sflag, size = 0x4, offset = 0, fixed_abs, tag = 'sflag constant byte address 0x0 - dummy sync flag']
  #allocation55 [shape = 's32[]', space=sflag, size = 0x4, offset = 0, fixed_abs, tag = 'sflag constant byte address 0x0 - dummy sync flag']
  #allocation56 [shape = 's32[]', space=sflag, size = 0x4, offset = 0, fixed_abs, tag = 'sflag constant byte address 0x0 - dummy sync flag']
  #allocation57 [shape = 's32[]', space=sflag, size = 0x4, offset = 0, fixed_abs, tag = 'sflag constant byte address 0x0 - dummy sync flag']
  #allocation58 [shape = 's32[]', space=sflag, size = 0x4, offset = 0, fixed_abs, tag = 'sflag constant byte address 0x0 - dummy sync flag']
  #allocation59 [shape = 's32[]', space=sflag, size = 0x4, offset = 0, fixed_abs, tag = 'sflag constant byte address 0x0 - dummy sync flag']
  #allocation60 [shape = 's32[]', space=sflag, size = 0x4, offset = 0, fixed_abs, tag = 'sflag constant byte address 0x0 - dummy sync flag']
  #allocation61 [shape = 's32[]', space=sflag, size = 0x4, offset = 0, fixed_abs, tag = 'sflag constant byte address 0x0 - dummy sync flag']
  #allocation62 [shape = 's32[]', space=sflag, size = 0x4, offset = 0, fixed_abs, tag = 'sflag constant byte address 0x0 - dummy sync flag']
  #allocation63 [shape = 's32[]', space=sflag, size = 0x4, offset = 0, fixed_abs, tag = 'sflag constant byte address 0x0 - dummy sync flag']
  #allocation64 [shape = 's32[]', space=sflag, size = 0x4, offset = 0, fixed_abs, tag = 'sflag constant byte address 0x0 - dummy sync flag']
  #allocation65 [shape = 's32[]', space=sflag, size = 0x4, offset = 0, fixed_abs, tag = 'sflag constant byte address 0x0 - dummy sync flag']
  #allocation66 [shape = 's32[]', space=sflag, size = 0x4, offset = 0, fixed_abs, tag = 'sflag constant byte address 0x0 - dummy sync flag']
  #allocation67 [shape = 's32[]', space=sflag, size = 0x4, offset = 0, fixed_abs, tag = 'sflag constant byte address 0x0 - dummy sync flag']
  #allocation68 [shape = 's32[]', space=sflag, size = 0x4, offset = 0, fixed_abs, tag = 'sflag constant byte address 0x0 - dummy sync flag']
  #allocation69 [shape = 's32[]', space=sflag, size = 0x4, offset = 0, fixed_abs, tag = 'sflag constant byte address 0x0 - dummy sync flag']
  #allocation70 [shape = 's32[]', space=sflag, size = 0x4, offset = 0, fixed_abs, tag = 'sflag constant byte address 0x0 - dummy sync flag']
  #allocation71 [shape = 's32[]', space=sflag, size = 0x4, offset = 0, fixed_abs, tag = 'sflag constant byte address 0x0 - dummy sync flag']
  #allocation72 [shape = 's32[]', space=sflag, size = 0x4, offset = 0, fixed_abs, tag = 'sflag constant byte address 0x0 - dummy sync flag']
  #allocation73 [shape = 's32[]', space=sflag, size = 0x4, offset = 0, fixed_abs, tag = 'sflag constant byte address 0x0 - dummy sync flag']
  %s0 = inlined_call_operand.hbm [shape: s32[16], index: 0, kind: input, shape index: {}]
  %s1 = inlined_call_operand.hbm [shape: f32[1000,128], index: 1, kind: input, shape index: {}]
  %s2 = inlined_call_operand.hbm [shape: f32[16,128], index: 2, kind: output, shape index: {}]
  %s3 = sld [smem:[#allocation0]]
  $region146: #{tpu_custom_call.1} parent=0
    _
  %s5 = ssub.s32 1, %s3
  %s6 = scalar_select 0, %s5, %s3
  %8 = dma.hbm_to_smem %s0, 16, [#allocation5], [#allocation4]
  %9 = dma.done [#allocation4], 16
  %10 = sfence
  $region1: #{tpu_custom_call.1} parent=0
    #allocation6 [shape = 'u8[8192]{0}', space=vmem, size = 0x2000, scoped, tag = 'output window, operand 0, single buffered']
    #allocation7 [shape = 's32[1]{0}', space=sflag, size = 0x4, scoped, tag = 'scoped memory for tpu_custom_call.1']
    %11 = vsyncpa [#allocation7], 0
    %s12 = ssub.s32 0, 0
    %s13 = ssub.s32 0, 0
    %p14 = scmp.ne.s32.totalorder 0, 0
    %p15 = scmp.lt.s32.totalorder 0, 0
    %p16 = pnand %p15, %p14
    %p17 = pneg %p16
    %s18 = sadd.s32 0, 2
    %s19 = scalar_select %p17, %s18, 0
    %p20 = scmp.eq.s32.totalorder 0, 0
    // Predicated region
    $region2: #{tpu_custom_call.1} parent=1 // pred_check
      %p21 = pneg %p20
    $region3: #{tpu_custom_call.1} parent=1 // pred_check_branch
      %23 = sbr.rel (%p21) target = $region5
    $region4: #{tpu_custom_call.1} parent=1 // pred_region
      %s24 = sld [smem:[#allocation5]]
      %s25 = smul.addr %s24, 16
      %s26 = scalar_lea.hbm %s1, %s25
      // Predicated region
      $region6: #{tpu_custom_call.1} parent=4 // pred_check
        _
      $region7: #{tpu_custom_call.1} parent=4 // pred_check_branch
        %28 = sbr.rel target = $region9
      $region8: #{tpu_custom_call.1} parent=4 // pred_region
        %29 = sst [smem:[#allocation10]] [#allocation9]
        %30 = sst [smem:[#allocation11]] [#allocation8]
      $region9: #{tpu_custom_call.1} parent=4 // pred_fallthru
        _
      %32 = shalt.err (0)
      %s34 = sshll.u32 [#allocation2], 4
      %s35 = int_to_ptr.vmem [resolvable:$true] %s34
      %37 = dma.hbm_to_vmem [thread:$0]  %s26, 16, %s35, [#allocation3]
      %s38 = sld [smem:[#allocation5 + $0x1]]
      %s39 = smul.addr %s38, 16
      %s40 = scalar_lea.hbm %s1, %s39
      %s41 = scalar_lea.vmem [#allocation2], 1
      %s42 = scalar_lea.sflag [#allocation3], 1
      // Predicated region
      $region10: #{tpu_custom_call.1} parent=4 // pred_check
        _
      $region11: #{tpu_custom_call.1} parent=4 // pred_check_branch
        %44 = sbr.rel target = $region13
      $region12: #{tpu_custom_call.1} parent=4 // pred_region
        %45 = sst [smem:[#allocation10]] [#allocation13]
        %46 = sst [smem:[#allocation11]] [#allocation12]
      $region13: #{tpu_custom_call.1} parent=4 // pred_fallthru
        _
      %48 = shalt.err (0)
      %s50 = sshll.u32 %s41, 4
      %s51 = int_to_ptr.vmem [resolvable:$true] %s50
      %53 = dma.hbm_to_vmem [thread:$0]  %s40, 16, %s51, %s42
      %s54 = sld [smem:[#allocation5 + $0x2]]
      %s55 = smul.addr %s54, 16
      %s56 = scalar_lea.hbm %s1, %s55
      %s57 = scalar_lea.vmem [#allocation2], 2
      %s58 = scalar_lea.sflag [#allocation3], 2
      // Predicated region
      $region14: #{tpu_custom_call.1} parent=4 // pred_check
        _
      $region15: #{tpu_custom_call.1} parent=4 // pred_check_branch
        %60 = sbr.rel target = $region17
      $region16: #{tpu_custom_call.1} parent=4 // pred_region
        %61 = sst [smem:[#allocation10]] [#allocation15]
        %62 = sst [smem:[#allocation11]] [#allocation14]
      $region17: #{tpu_custom_call.1} parent=4 // pred_fallthru
        _
      %64 = shalt.err (0)
      %s66 = sshll.u32 %s57, 4
      %s67 = int_to_ptr.vmem [resolvable:$true] %s66
      %69 = dma.hbm_to_vmem [thread:$0]  %s56, 16, %s67, %s58
      %s70 = sld [smem:[#allocation5 + $0x3]]
      %s71 = smul.addr %s70, 16
      %s72 = scalar_lea.hbm %s1, %s71
      %s73 = scalar_lea.vmem [#allocation2], 3
      %s74 = scalar_lea.sflag [#allocation3], 3
      // Predicated region
      $region18: #{tpu_custom_call.1} parent=4 // pred_check
        _
      $region19: #{tpu_custom_call.1} parent=4 // pred_check_branch
        %76 = sbr.rel target = $region21
      $region20: #{tpu_custom_call.1} parent=4 // pred_region
        %77 = sst [smem:[#allocation10]] [#allocation17]
        %78 = sst [smem:[#allocation11]] [#allocation16]
      $region21: #{tpu_custom_call.1} parent=4 // pred_fallthru
        _
      %80 = shalt.err (0)
      %s82 = sshll.u32 %s73, 4
      %s83 = int_to_ptr.vmem [resolvable:$true] %s82
      %85 = dma.hbm_to_vmem [thread:$0]  %s72, 16, %s83, %s74
      %s86 = sld [smem:[#allocation5 + $0x4]]
      %s87 = smul.addr %s86, 16
      %s88 = scalar_lea.hbm %s1, %s87
      %s89 = scalar_lea.vmem [#allocation2], 4
      %s90 = scalar_lea.sflag [#allocation3], 4
      // Predicated region
      $region22: #{tpu_custom_call.1} parent=4 // pred_check
        _
      $region23: #{tpu_custom_call.1} parent=4 // pred_check_branch
        %92 = sbr.rel target = $region25
      $region24: #{tpu_custom_call.1} parent=4 // pred_region
        %93 = sst [smem:[#allocation10]] [#allocation19]
        %94 = sst [smem:[#allocation11]] [#allocation18]
      $region25: #{tpu_custom_call.1} parent=4 // pred_fallthru
        _
      %96 = shalt.err (0)
      %s98 = sshll.u32 %s89, 4
      %s99 = int_to_ptr.vmem [resolvable:$true] %s98
      %101 = dma.hbm_to_vmem [thread:$0]  %s88, 16, %s99, %s90
      %s102 = sld [smem:[#allocation5 + $0x5]]
      %s103 = smul.addr %s102, 16
      %s104 = scalar_lea.hbm %s1, %s103
      %s105 = scalar_lea.vmem [#allocation2], 5
      %s106 = scalar_lea.sflag [#allocation3], 5
      // Predicated region
      $region26: #{tpu_custom_call.1} parent=4 // pred_check
        _
      $region27: #{tpu_custom_call.1} parent=4 // pred_check_branch
        %108 = sbr.rel target = $region29
      $region28: #{tpu_custom_call.1} parent=4 // pred_region
        %109 = sst [smem:[#allocation10]] [#allocation21]
        %110 = sst [smem:[#allocation11]] [#allocation20]
      $region29: #{tpu_custom_call.1} parent=4 // pred_fallthru
        _
      %112 = shalt.err (0)
      %s114 = sshll.u32 %s105, 4
      %s115 = int_to_ptr.vmem [resolvable:$true] %s114
      %117 = dma.hbm_to_vmem [thread:$0]  %s104, 16, %s115, %s106
      %s118 = sld [smem:[#allocation5 + $0x6]]
      %s119 = smul.addr %s118, 16
      %s120 = scalar_lea.hbm %s1, %s119
      %s121 = scalar_lea.vmem [#allocation2], 6
      %s122 = scalar_lea.sflag [#allocation3], 6
      // Predicated region
      $region30: #{tpu_custom_call.1} parent=4 // pred_check
        _
      $region31: #{tpu_custom_call.1} parent=4 // pred_check_branch
        %124 = sbr.rel target = $region33
      $region32: #{tpu_custom_call.1} parent=4 // pred_region
        %125 = sst [smem:[#allocation10]] [#allocation23]
        %126 = sst [smem:[#allocation11]] [#allocation22]
      $region33: #{tpu_custom_call.1} parent=4 // pred_fallthru
        _
      %128 = shalt.err (0)
      %s130 = sshll.u32 %s121, 4
      %s131 = int_to_ptr.vmem [resolvable:$true] %s130
      %133 = dma.hbm_to_vmem [thread:$0]  %s120, 16, %s131, %s122
      %s134 = sld [smem:[#allocation5 + $0x7]]
      %s135 = smul.addr %s134, 16
      %s136 = scalar_lea.hbm %s1, %s135
      %s137 = scalar_lea.vmem [#allocation2], 7
      %s138 = scalar_lea.sflag [#allocation3], 7
      // Predicated region
      $region34: #{tpu_custom_call.1} parent=4 // pred_check
        _
      $region35: #{tpu_custom_call.1} parent=4 // pred_check_branch
        %140 = sbr.rel target = $region37
      $region36: #{tpu_custom_call.1} parent=4 // pred_region
        %141 = sst [smem:[#allocation10]] [#allocation25]
        %142 = sst [smem:[#allocation11]] [#allocation24]
      $region37: #{tpu_custom_call.1} parent=4 // pred_fallthru
        _
      %144 = shalt.err (0)
      %s146 = sshll.u32 %s137, 4
      %s147 = int_to_ptr.vmem [resolvable:$true] %s146
      %149 = dma.hbm_to_vmem [thread:$0]  %s136, 16, %s147, %s138
      %s150 = sld [smem:[#allocation5 + $0x8]]
      %s151 = smul.addr %s150, 16
      %s152 = scalar_lea.hbm %s1, %s151
      %s153 = scalar_lea.vmem [#allocation2], 8
      %s154 = scalar_lea.sflag [#allocation3], 8
      // Predicated region
      $region38: #{tpu_custom_call.1} parent=4 // pred_check
        _
      $region39: #{tpu_custom_call.1} parent=4 // pred_check_branch
        %156 = sbr.rel target = $region41
      $region40: #{tpu_custom_call.1} parent=4 // pred_region
        %157 = sst [smem:[#allocation10]] [#allocation27]
        %158 = sst [smem:[#allocation11]] [#allocation26]
      $region41: #{tpu_custom_call.1} parent=4 // pred_fallthru
        _
      %160 = shalt.err (0)
      %s162 = sshll.u32 %s153, 4
      %s163 = int_to_ptr.vmem [resolvable:$true] %s162
      %165 = dma.hbm_to_vmem [thread:$0]  %s152, 16, %s163, %s154
      %s166 = sld [smem:[#allocation5 + $0x9]]
      %s167 = smul.addr %s166, 16
      %s168 = scalar_lea.hbm %s1, %s167
      %s169 = scalar_lea.vmem [#allocation2], 9
      %s170 = scalar_lea.sflag [#allocation3], 9
      // Predicated region
      $region42: #{tpu_custom_call.1} parent=4 // pred_check
        _
      $region43: #{tpu_custom_call.1} parent=4 // pred_check_branch
        %172 = sbr.rel target = $region45
      $region44: #{tpu_custom_call.1} parent=4 // pred_region
        %173 = sst [smem:[#allocation10]] [#allocation29]
        %174 = sst [smem:[#allocation11]] [#allocation28]
      $region45: #{tpu_custom_call.1} parent=4 // pred_fallthru
        _
      %176 = shalt.err (0)
      %s178 = sshll.u32 %s169, 4
      %s179 = int_to_ptr.vmem [resolvable:$true] %s178
      %181 = dma.hbm_to_vmem [thread:$0]  %s168, 16, %s179, %s170
      %s182 = sld [smem:[#allocation5 + $0xa]]
      %s183 = smul.addr %s182, 16
      %s184 = scalar_lea.hbm %s1, %s183
      %s185 = scalar_lea.vmem [#allocation2], 10
      %s186 = scalar_lea.sflag [#allocation3], 10
      // Predicated region
      $region46: #{tpu_custom_call.1} parent=4 // pred_check
        _
      $region47: #{tpu_custom_call.1} parent=4 // pred_check_branch
        %188 = sbr.rel target = $region49
      $region48: #{tpu_custom_call.1} parent=4 // pred_region
        %189 = sst [smem:[#allocation10]] [#allocation31]
        %190 = sst [smem:[#allocation11]] [#allocation30]
      $region49: #{tpu_custom_call.1} parent=4 // pred_fallthru
        _
      %192 = shalt.err (0)
      %s194 = sshll.u32 %s185, 4
      %s195 = int_to_ptr.vmem [resolvable:$true] %s194
      %197 = dma.hbm_to_vmem [thread:$0]  %s184, 16, %s195, %s186
      %s198 = sld [smem:[#allocation5 + $0xb]]
      %s199 = smul.addr %s198, 16
      %s200 = scalar_lea.hbm %s1, %s199
      %s201 = scalar_lea.vmem [#allocation2], 11
      %s202 = scalar_lea.sflag [#allocation3], 11
      // Predicated region
      $region50: #{tpu_custom_call.1} parent=4 // pred_check
        _
      $region51: #{tpu_custom_call.1} parent=4 // pred_check_branch
        %204 = sbr.rel target = $region53
      $region52: #{tpu_custom_call.1} parent=4 // pred_region
        %205 = sst [smem:[#allocation10]] [#allocation33]
        %206 = sst [smem:[#allocation11]] [#allocation32]
      $region53: #{tpu_custom_call.1} parent=4 // pred_fallthru
        _
      %208 = shalt.err (0)
      %s210 = sshll.u32 %s201, 4
      %s211 = int_to_ptr.vmem [resolvable:$true] %s210
      %213 = dma.hbm_to_vmem [thread:$0]  %s200, 16, %s211, %s202
      %s214 = sld [smem:[#allocation5 + $0xc]]
      %s215 = smul.addr %s214, 16
      %s216 = scalar_lea.hbm %s1, %s215
      %s217 = scalar_lea.vmem [#allocation2], 12
      %s218 = scalar_lea.sflag [#allocation3], 12
      // Predicated region
      $region54: #{tpu_custom_call.1} parent=4 // pred_check
        _
      $region55: #{tpu_custom_call.1} parent=4 // pred_check_branch
        %220 = sbr.rel target = $region57
      $region56: #{tpu_custom_call.1} parent=4 // pred_region
        %221 = sst [smem:[#allocation10]] [#allocation35]
        %222 = sst [smem:[#allocation11]] [#allocation34]
      $region57: #{tpu_custom_call.1} parent=4 // pred_fallthru
        _
      %224 = shalt.err (0)
      %s226 = sshll.u32 %s217, 4
      %s227 = int_to_ptr.vmem [resolvable:$true] %s226
      %229 = dma.hbm_to_vmem [thread:$0]  %s216, 16, %s227, %s218
      %s230 = sld [smem:[#allocation5 + $0xd]]
      %s231 = smul.addr %s230, 16
      %s232 = scalar_lea.hbm %s1, %s231
      %s233 = scalar_lea.vmem [#allocation2], 13
      %s234 = scalar_lea.sflag [#allocation3], 13
      // Predicated region
      $region58: #{tpu_custom_call.1} parent=4 // pred_check
        _
      $region59: #{tpu_custom_call.1} parent=4 // pred_check_branch
        %236 = sbr.rel target = $region61
      $region60: #{tpu_custom_call.1} parent=4 // pred_region
        %237 = sst [smem:[#allocation10]] [#allocation37]
        %238 = sst [smem:[#allocation11]] [#allocation36]
      $region61: #{tpu_custom_call.1} parent=4 // pred_fallthru
        _
      %240 = shalt.err (0)
      %s242 = sshll.u32 %s233, 4
      %s243 = int_to_ptr.vmem [resolvable:$true] %s242
      %245 = dma.hbm_to_vmem [thread:$0]  %s232, 16, %s243, %s234
      %s246 = sld [smem:[#allocation5 + $0xe]]
      %s247 = smul.addr %s246, 16
      %s248 = scalar_lea.hbm %s1, %s247
      %s249 = scalar_lea.vmem [#allocation2], 14
      %s250 = scalar_lea.sflag [#allocation3], 14
      // Predicated region
      $region62: #{tpu_custom_call.1} parent=4 // pred_check
        _
      $region63: #{tpu_custom_call.1} parent=4 // pred_check_branch
        %252 = sbr.rel target = $region65
      $region64: #{tpu_custom_call.1} parent=4 // pred_region
        %253 = sst [smem:[#allocation10]] [#allocation39]
        %254 = sst [smem:[#allocation11]] [#allocation38]
      $region65: #{tpu_custom_call.1} parent=4 // pred_fallthru
        _
      %256 = shalt.err (0)
      %s258 = sshll.u32 %s249, 4
      %s259 = int_to_ptr.vmem [resolvable:$true] %s258
      %261 = dma.hbm_to_vmem [thread:$0]  %s248, 16, %s259, %s250
      %s262 = sld [smem:[#allocation5 + $0xf]]
      %s263 = smul.addr %s262, 16
      %s264 = scalar_lea.hbm %s1, %s263
      %s265 = scalar_lea.vmem [#allocation2], 15
      %s266 = scalar_lea.sflag [#allocation3], 15
      // Predicated region
      $region66: #{tpu_custom_call.1} parent=4 // pred_check
        _
      $region67: #{tpu_custom_call.1} parent=4 // pred_check_branch
        %268 = sbr.rel target = $region69
      $region68: #{tpu_custom_call.1} parent=4 // pred_region
        %269 = sst [smem:[#allocation10]] [#allocation41]
        %270 = sst [smem:[#allocation11]] [#allocation40]
      $region69: #{tpu_custom_call.1} parent=4 // pred_fallthru
        _
      %272 = shalt.err (0)
      %s274 = sshll.u32 %s265, 4
      %s275 = int_to_ptr.vmem [resolvable:$true] %s274
      %277 = dma.hbm_to_vmem [thread:$0]  %s264, 16, %s275, %s266
    $region5: #{tpu_custom_call.1} parent=1 // pred_fallthru
      _
    %s278 = sadd.s32 0, 1
    %p279 = scmp.lt.s32.totalorder %s278, 1
    // Predicated region
    $region70: #{tpu_custom_call.1} parent=1 // pred_check
      %p280 = pneg %p279
    $region71: #{tpu_custom_call.1} parent=1 // pred_check_branch
      %282 = sbr.rel (%p280) target = $region73
    $region72: #{tpu_custom_call.1} parent=1 // pred_region
      %s283 = ssub.s32 1, %s19
      %s284 = smul.u32 %s278, 16
      %s285 = sld [smem:[#allocation5 + %s284]]
      %s286 = smul.addr %s285, 16
      %s287 = scalar_lea.hbm %s1, %s286
      %s288 = smul.u32 %s283, 16
      %s289 = scalar_lea.vmem [#allocation2], %s288
      %s290 = scalar_lea.sflag [#allocation3], %s288
      // Predicated region
      $region74: #{tpu_custom_call.1} parent=72 // pred_check
        _
      $region75: #{tpu_custom_call.1} parent=72 // pred_check_branch
        %292 = sbr.rel target = $region77
      $region76: #{tpu_custom_call.1} parent=72 // pred_region
        %293 = sst [smem:[#allocation10]] [#allocation43]
        %294 = sst [smem:[#allocation11]] [#allocation42]
      $region77: #{tpu_custom_call.1} parent=72 // pred_fallthru
        _
      %296 = shalt.err (0)
      %s298 = sshll.u32 %s289, 4
      %s299 = int_to_ptr.vmem [resolvable:$true] %s298
      %301 = dma.hbm_to_vmem [thread:$0]  %s287, 16, %s299, %s290
      %s302 = sadd.s32 %s284, 1
      %s303 = sld [smem:[#allocation5 + %s302]]
      %s304 = smul.addr %s303, 16
      %s305 = scalar_lea.hbm %s1, %s304
      %s306 = sadd.s32 1, %s288
      %s307 = scalar_lea.vmem [#allocation2], %s306
      %s308 = scalar_lea.sflag [#allocation3], %s306
      // Predicated region
      $region78: #{tpu_custom_call.1} parent=72 // pred_check
        _
      $region79: #{tpu_custom_call.1} parent=72 // pred_check_branch
        %310 = sbr.rel target = $region81
      $region80: #{tpu_custom_call.1} parent=72 // pred_region
        %311 = sst [smem:[#allocation10]] [#allocation45]
        %312 = sst [smem:[#allocation11]] [#allocation44]
      $region81: #{tpu_custom_call.1} parent=72 // pred_fallthru
        _
      %314 = shalt.err (0)
      %s316 = sshll.u32 %s307, 4
      %s317 = int_to_ptr.vmem [resolvable:$true] %s316
      %319 = dma.hbm_to_vmem [thread:$0]  %s305, 16, %s317, %s308
      %s320 = sadd.s32 %s284, 2
      %s321 = sld [smem:[#allocation5 + %s320]]
      %s322 = smul.addr %s321, 16
      %s323 = scalar_lea.hbm %s1, %s322
      %s324 = sadd.s32 2, %s288
      %s325 = scalar_lea.vmem [#allocation2], %s324
      %s326 = scalar_lea.sflag [#allocation3], %s324
      // Predicated region
      $region82: #{tpu_custom_call.1} parent=72 // pred_check
        _
      $region83: #{tpu_custom_call.1} parent=72 // pred_check_branch
        %328 = sbr.rel target = $region85
      $region84: #{tpu_custom_call.1} parent=72 // pred_region
        %329 = sst [smem:[#allocation10]] [#allocation47]
        %330 = sst [smem:[#allocation11]] [#allocation46]
      $region85: #{tpu_custom_call.1} parent=72 // pred_fallthru
        _
      %332 = shalt.err (0)
      %s334 = sshll.u32 %s325, 4
      %s335 = int_to_ptr.vmem [resolvable:$true] %s334
      %337 = dma.hbm_to_vmem [thread:$0]  %s323, 16, %s335, %s326
      %s338 = sadd.s32 %s284, 3
      %s339 = sld [smem:[#allocation5 + %s338]]
      %s340 = smul.addr %s339, 16
      %s341 = scalar_lea.hbm %s1, %s340
      %s342 = sadd.s32 3, %s288
      %s343 = scalar_lea.vmem [#allocation2], %s342
      %s344 = scalar_lea.sflag [#allocation3], %s342
      // Predicated region
      $region86: #{tpu_custom_call.1} parent=72 // pred_check
        _
      $region87: #{tpu_custom_call.1} parent=72 // pred_check_branch
        %346 = sbr.rel target = $region89
      $region88: #{tpu_custom_call.1} parent=72 // pred_region
        %347 = sst [smem:[#allocation10]] [#allocation49]
        %348 = sst [smem:[#allocation11]] [#allocation48]
      $region89: #{tpu_custom_call.1} parent=72 // pred_fallthru
        _
      %350 = shalt.err (0)
      %s352 = sshll.u32 %s343, 4
      %s353 = int_to_ptr.vmem [resolvable:$true] %s352
      %355 = dma.hbm_to_vmem [thread:$0]  %s341, 16, %s353, %s344
      %s356 = sadd.s32 %s284, 4
      %s357 = sld [smem:[#allocation5 + %s356]]
      %s358 = smul.addr %s357, 16
      %s359 = scalar_lea.hbm %s1, %s358
      %s360 = sadd.s32 4, %s288
      %s361 = scalar_lea.vmem [#allocation2], %s360
      %s362 = scalar_lea.sflag [#allocation3], %s360
      // Predicated region
      $region90: #{tpu_custom_call.1} parent=72 // pred_check
        _
      $region91: #{tpu_custom_call.1} parent=72 // pred_check_branch
        %364 = sbr.rel target = $region93
      $region92: #{tpu_custom_call.1} parent=72 // pred_region
        %365 = sst [smem:[#allocation10]] [#allocation51]
        %366 = sst [smem:[#allocation11]] [#allocation50]
      $region93: #{tpu_custom_call.1} parent=72 // pred_fallthru
        _
      %368 = shalt.err (0)
      %s370 = sshll.u32 %s361, 4
      %s371 = int_to_ptr.vmem [resolvable:$true] %s370
      %373 = dma.hbm_to_vmem [thread:$0]  %s359, 16, %s371, %s362
      %s374 = sadd.s32 %s284, 5
      %s375 = sld [smem:[#allocation5 + %s374]]
      %s376 = smul.addr %s375, 16
      %s377 = scalar_lea.hbm %s1, %s376
      %s378 = sadd.s32 5, %s288
      %s379 = scalar_lea.vmem [#allocation2], %s378
      %s380 = scalar_lea.sflag [#allocation3], %s378
      // Predicated region
      $region94: #{tpu_custom_call.1} parent=72 // pred_check
        _
      $region95: #{tpu_custom_call.1} parent=72 // pred_check_branch
        %382 = sbr.rel target = $region97
      $region96: #{tpu_custom_call.1} parent=72 // pred_region
        %383 = sst [smem:[#allocation10]] [#allocation53]
        %384 = sst [smem:[#allocation11]] [#allocation52]
      $region97: #{tpu_custom_call.1} parent=72 // pred_fallthru
        _
      %386 = shalt.err (0)
      %s388 = sshll.u32 %s379, 4
      %s389 = int_to_ptr.vmem [resolvable:$true] %s388
      %391 = dma.hbm_to_vmem [thread:$0]  %s377, 16, %s389, %s380
      %s392 = sadd.s32 %s284, 6
      %s393 = sld [smem:[#allocation5 + %s392]]
      %s394 = smul.addr %s393, 16
      %s395 = scalar_lea.hbm %s1, %s394
      %s396 = sadd.s32 6, %s288
      %s397 = scalar_lea.vmem [#allocation2], %s396
      %s398 = scalar_lea.sflag [#allocation3], %s396
      // Predicated region
      $region98: #{tpu_custom_call.1} parent=72 // pred_check
        _
      $region99: #{tpu_custom_call.1} parent=72 // pred_check_branch
        %400 = sbr.rel target = $region101
      $region100: #{tpu_custom_call.1} parent=72 // pred_region
        %401 = sst [smem:[#allocation10]] [#allocation55]
        %402 = sst [smem:[#allocation11]] [#allocation54]
      $region101: #{tpu_custom_call.1} parent=72 // pred_fallthru
        _
      %404 = shalt.err (0)
      %s406 = sshll.u32 %s397, 4
      %s407 = int_to_ptr.vmem [resolvable:$true] %s406
      %409 = dma.hbm_to_vmem [thread:$0]  %s395, 16, %s407, %s398
      %s410 = sadd.s32 %s284, 7
      %s411 = sld [smem:[#allocation5 + %s410]]
      %s412 = smul.addr %s411, 16
      %s413 = scalar_lea.hbm %s1, %s412
      %s414 = sadd.s32 7, %s288
      %s415 = scalar_lea.vmem [#allocation2], %s414
      %s416 = scalar_lea.sflag [#allocation3], %s414
      // Predicated region
      $region102: #{tpu_custom_call.1} parent=72 // pred_check
        _
      $region103: #{tpu_custom_call.1} parent=72 // pred_check_branch
        %418 = sbr.rel target = $region105
      $region104: #{tpu_custom_call.1} parent=72 // pred_region
        %419 = sst [smem:[#allocation10]] [#allocation57]
        %420 = sst [smem:[#allocation11]] [#allocation56]
      $region105: #{tpu_custom_call.1} parent=72 // pred_fallthru
        _
      %422 = shalt.err (0)
      %s424 = sshll.u32 %s415, 4
      %s425 = int_to_ptr.vmem [resolvable:$true] %s424
      %427 = dma.hbm_to_vmem [thread:$0]  %s413, 16, %s425, %s416
      %s428 = sadd.s32 %s284, 8
      %s429 = sld [smem:[#allocation5 + %s428]]
      %s430 = smul.addr %s429, 16
      %s431 = scalar_lea.hbm %s1, %s430
      %s432 = sadd.s32 8, %s288
      %s433 = scalar_lea.vmem [#allocation2], %s432
      %s434 = scalar_lea.sflag [#allocation3], %s432
      // Predicated region
      $region106: #{tpu_custom_call.1} parent=72 // pred_check
        _
      $region107: #{tpu_custom_call.1} parent=72 // pred_check_branch
        %436 = sbr.rel target = $region109
      $region108: #{tpu_custom_call.1} parent=72 // pred_region
        %437 = sst [smem:[#allocation10]] [#allocation59]
        %438 = sst [smem:[#allocation11]] [#allocation58]
      $region109: #{tpu_custom_call.1} parent=72 // pred_fallthru
        _
      %440 = shalt.err (0)
      %s442 = sshll.u32 %s433, 4
      %s443 = int_to_ptr.vmem [resolvable:$true] %s442
      %445 = dma.hbm_to_vmem [thread:$0]  %s431, 16, %s443, %s434
      %s446 = sadd.s32 %s284, 9
      %s447 = sld [smem:[#allocation5 + %s446]]
      %s448 = smul.addr %s447, 16
      %s449 = scalar_lea.hbm %s1, %s448
      %s450 = sadd.s32 9, %s288
      %s451 = scalar_lea.vmem [#allocation2], %s450
      %s452 = scalar_lea.sflag [#allocation3], %s450
      // Predicated region
      $region110: #{tpu_custom_call.1} parent=72 // pred_check
        _
      $region111: #{tpu_custom_call.1} parent=72 // pred_check_branch
        %454 = sbr.rel target = $region113
      $region112: #{tpu_custom_call.1} parent=72 // pred_region
        %455 = sst [smem:[#allocation10]] [#allocation61]
        %456 = sst [smem:[#allocation11]] [#allocation60]
      $region113: #{tpu_custom_call.1} parent=72 // pred_fallthru
        _
      %458 = shalt.err (0)
      %s460 = sshll.u32 %s451, 4
      %s461 = int_to_ptr.vmem [resolvable:$true] %s460
      %463 = dma.hbm_to_vmem [thread:$0]  %s449, 16, %s461, %s452
      %s464 = sadd.s32 %s284, 10
      %s465 = sld [smem:[#allocation5 + %s464]]
      %s466 = smul.addr %s465, 16
      %s467 = scalar_lea.hbm %s1, %s466
      %s468 = sadd.s32 10, %s288
      %s469 = scalar_lea.vmem [#allocation2], %s468
      %s470 = scalar_lea.sflag [#allocation3], %s468
      // Predicated region
      $region114: #{tpu_custom_call.1} parent=72 // pred_check
        _
      $region115: #{tpu_custom_call.1} parent=72 // pred_check_branch
        %472 = sbr.rel target = $region117
      $region116: #{tpu_custom_call.1} parent=72 // pred_region
        %473 = sst [smem:[#allocation10]] [#allocation63]
        %474 = sst [smem:[#allocation11]] [#allocation62]
      $region117: #{tpu_custom_call.1} parent=72 // pred_fallthru
        _
      %476 = shalt.err (0)
      %s478 = sshll.u32 %s469, 4
      %s479 = int_to_ptr.vmem [resolvable:$true] %s478
      %481 = dma.hbm_to_vmem [thread:$0]  %s467, 16, %s479, %s470
      %s482 = sadd.s32 %s284, 11
      %s483 = sld [smem:[#allocation5 + %s482]]
      %s484 = smul.addr %s483, 16
      %s485 = scalar_lea.hbm %s1, %s484
      %s486 = sadd.s32 11, %s288
      %s487 = scalar_lea.vmem [#allocation2], %s486
      %s488 = scalar_lea.sflag [#allocation3], %s486
      // Predicated region
      $region118: #{tpu_custom_call.1} parent=72 // pred_check
        _
      $region119: #{tpu_custom_call.1} parent=72 // pred_check_branch
        %490 = sbr.rel target = $region121
      $region120: #{tpu_custom_call.1} parent=72 // pred_region
        %491 = sst [smem:[#allocation10]] [#allocation65]
        %492 = sst [smem:[#allocation11]] [#allocation64]
      $region121: #{tpu_custom_call.1} parent=72 // pred_fallthru
        _
      %494 = shalt.err (0)
      %s496 = sshll.u32 %s487, 4
      %s497 = int_to_ptr.vmem [resolvable:$true] %s496
      %499 = dma.hbm_to_vmem [thread:$0]  %s485, 16, %s497, %s488
      %s500 = sadd.s32 %s284, 12
      %s501 = sld [smem:[#allocation5 + %s500]]
      %s502 = smul.addr %s501, 16
      %s503 = scalar_lea.hbm %s1, %s502
      %s504 = sadd.s32 12, %s288
      %s505 = scalar_lea.vmem [#allocation2], %s504
      %s506 = scalar_lea.sflag [#allocation3], %s504
      // Predicated region
      $region122: #{tpu_custom_call.1} parent=72 // pred_check
        _
      $region123: #{tpu_custom_call.1} parent=72 // pred_check_branch
        %508 = sbr.rel target = $region125
      $region124: #{tpu_custom_call.1} parent=72 // pred_region
        %509 = sst [smem:[#allocation10]] [#allocation67]
        %510 = sst [smem:[#allocation11]] [#allocation66]
      $region125: #{tpu_custom_call.1} parent=72 // pred_fallthru
        _
      %512 = shalt.err (0)
      %s514 = sshll.u32 %s505, 4
      %s515 = int_to_ptr.vmem [resolvable:$true] %s514
      %517 = dma.hbm_to_vmem [thread:$0]  %s503, 16, %s515, %s506
      %s518 = sadd.s32 %s284, 13
      %s519 = sld [smem:[#allocation5 + %s518]]
      %s520 = smul.addr %s519, 16
      %s521 = scalar_lea.hbm %s1, %s520
      %s522 = sadd.s32 13, %s288
      %s523 = scalar_lea.vmem [#allocation2], %s522
      %s524 = scalar_lea.sflag [#allocation3], %s522
      // Predicated region
      $region126: #{tpu_custom_call.1} parent=72 // pred_check
        _
      $region127: #{tpu_custom_call.1} parent=72 // pred_check_branch
        %526 = sbr.rel target = $region129
      $region128: #{tpu_custom_call.1} parent=72 // pred_region
        %527 = sst [smem:[#allocation10]] [#allocation69]
        %528 = sst [smem:[#allocation11]] [#allocation68]
      $region129: #{tpu_custom_call.1} parent=72 // pred_fallthru
        _
      %530 = shalt.err (0)
      %s532 = sshll.u32 %s523, 4
      %s533 = int_to_ptr.vmem [resolvable:$true] %s532
      %535 = dma.hbm_to_vmem [thread:$0]  %s521, 16, %s533, %s524
      %s536 = sadd.s32 %s284, 14
      %s537 = sld [smem:[#allocation5 + %s536]]
      %s538 = smul.addr %s537, 16
      %s539 = scalar_lea.hbm %s1, %s538
      %s540 = sadd.s32 14, %s288
      %s541 = scalar_lea.vmem [#allocation2], %s540
      %s542 = scalar_lea.sflag [#allocation3], %s540
      // Predicated region
      $region130: #{tpu_custom_call.1} parent=72 // pred_check
        _
      $region131: #{tpu_custom_call.1} parent=72 // pred_check_branch
        %544 = sbr.rel target = $region133
      $region132: #{tpu_custom_call.1} parent=72 // pred_region
        %545 = sst [smem:[#allocation10]] [#allocation71]
        %546 = sst [smem:[#allocation11]] [#allocation70]
      $region133: #{tpu_custom_call.1} parent=72 // pred_fallthru
        _
      %548 = shalt.err (0)
      %s550 = sshll.u32 %s541, 4
      %s551 = int_to_ptr.vmem [resolvable:$true] %s550
      %553 = dma.hbm_to_vmem [thread:$0]  %s539, 16, %s551, %s542
      %s554 = sadd.s32 %s284, 15
      %s555 = sld [smem:[#allocation5 + %s554]]
      %s556 = smul.addr %s555, 16
      %s557 = scalar_lea.hbm %s1, %s556
      %s558 = sadd.s32 15, %s288
      %s559 = scalar_lea.vmem [#allocation2], %s558
      %s560 = scalar_lea.sflag [#allocation3], %s558
      // Predicated region
      $region134: #{tpu_custom_call.1} parent=72 // pred_check
        _
      $region135: #{tpu_custom_call.1} parent=72 // pred_check_branch
        %562 = sbr.rel target = $region137
      $region136: #{tpu_custom_call.1} parent=72 // pred_region
        %563 = sst [smem:[#allocation10]] [#allocation73]
        %564 = sst [smem:[#allocation11]] [#allocation72]
      $region137: #{tpu_custom_call.1} parent=72 // pred_fallthru
        _
      %566 = shalt.err (0)
      %s568 = sshll.u32 %s559, 4
      %s569 = int_to_ptr.vmem [resolvable:$true] %s568
      %571 = dma.hbm_to_vmem [thread:$0]  %s557, 16, %s569, %s560
    $region73: #{tpu_custom_call.1} parent=1 // pred_fallthru
      _
    %s572 = smul.u32 %s19, 16
    %s573 = scalar_lea.sflag [#allocation3], %s572
    %s574 = smul.u32 1, 1
    %s575 = sshll.u32 %s574, 4
    %576 = dma.done %s573, %s575
    %s577 = sadd.s32 1, %s572
    %s578 = scalar_lea.sflag [#allocation3], %s577
    %s579 = sshll.u32 %s574, 4
    %580 = dma.done %s578, %s579
    %s581 = sadd.s32 2, %s572
    %s582 = scalar_lea.sflag [#allocation3], %s581
    %s583 = sshll.u32 %s574, 4
    %584 = dma.done %s582, %s583
    %s585 = sadd.s32 3, %s572
    %s586 = scalar_lea.sflag [#allocation3], %s585
    %s587 = sshll.u32 %s574, 4
    %588 = dma.done %s586, %s587
    %s589 = sadd.s32 4, %s572
    %s590 = scalar_lea.sflag [#allocation3], %s589
    %s591 = sshll.u32 %s574, 4
    %592 = dma.done %s590, %s591
    %s593 = sadd.s32 5, %s572
    %s594 = scalar_lea.sflag [#allocation3], %s593
    %s595 = sshll.u32 %s574, 4
    %596 = dma.done %s594, %s595
    %s597 = sadd.s32 6, %s572
    %s598 = scalar_lea.sflag [#allocation3], %s597
    %s599 = sshll.u32 %s574, 4
    %600 = dma.done %s598, %s599
    %s601 = sadd.s32 7, %s572
    %s602 = scalar_lea.sflag [#allocation3], %s601
    %s603 = sshll.u32 %s574, 4
    %604 = dma.done %s602, %s603
    %s605 = sadd.s32 8, %s572
    %s606 = scalar_lea.sflag [#allocation3], %s605
    %s607 = sshll.u32 %s574, 4
    %608 = dma.done %s606, %s607
    %s609 = sadd.s32 9, %s572
    %s610 = scalar_lea.sflag [#allocation3], %s609
    %s611 = sshll.u32 %s574, 4
    %612 = dma.done %s610, %s611
    %s613 = sadd.s32 10, %s572
    %s614 = scalar_lea.sflag [#allocation3], %s613
    %s615 = sshll.u32 %s574, 4
    %616 = dma.done %s614, %s615
    %s617 = sadd.s32 11, %s572
    %s618 = scalar_lea.sflag [#allocation3], %s617
    %s619 = sshll.u32 %s574, 4
    %620 = dma.done %s618, %s619
    %s621 = sadd.s32 12, %s572
    %s622 = scalar_lea.sflag [#allocation3], %s621
    %s623 = sshll.u32 %s574, 4
    %624 = dma.done %s622, %s623
    %s625 = sadd.s32 13, %s572
    %s626 = scalar_lea.sflag [#allocation3], %s625
    %s627 = sshll.u32 %s574, 4
    %628 = dma.done %s626, %s627
    %s629 = sadd.s32 14, %s572
    %s630 = scalar_lea.sflag [#allocation3], %s629
    %s631 = sshll.u32 %s574, 4
    %632 = dma.done %s630, %s631
    %s633 = sadd.s32 15, %s572
    %s634 = scalar_lea.sflag [#allocation3], %s633
    %s635 = sshll.u32 %s574, 4
    %636 = dma.done %s634, %s635
    %s637 = scalar_lea.vmem [#allocation2], %s572
    %v638 = vld [vmem:[%s637] sm:$0xff]
    %v639 = vld [vmem:[%s637 + $0x8] sm:$0xff]
    %v640 = vmul.f32 %v638, 11.313708
    %v641 = vmul.f32 %v639, 11.313708
    %642 = vst [vmem:[#allocation6] sm:$0xff] %v640
    %643 = vst [vmem:[#allocation6 + $0x8] sm:$0xff] %v641
    // Predicated region
    $region138: #{tpu_custom_call.1} parent=1 // pred_check
      _
    $region139: #{tpu_custom_call.1} parent=1 // pred_check_branch
      %645 = sbr.rel (0) target = $region141
    $region140: #{tpu_custom_call.1} parent=1 // pred_region
      %s647 = ssub.s32 256, 256
      %648 = vsyncadd [#allocation7], %s647
      %s649 = sshll.u32 [#allocation6], 4
      %s650 = int_to_ptr.vmem [resolvable:$true] %s649
      %655 = dma.vmem_to_hbm [thread:$0]  %s650, 256, %s2, [#allocation7], 128, 128, 8
    $region141: #{tpu_custom_call.1} parent=1 // pred_fallthru
      _
    // Predicated region
    $region142: #{tpu_custom_call.1} parent=1 // pred_check
      _
    $region143: #{tpu_custom_call.1} parent=1 // pred_check_branch
      %657 = sbr.rel (0) target = $region145
    $region144: #{tpu_custom_call.1} parent=1 // pred_region
      %658 = dma.done [#allocation7], 256
    $region145: #{tpu_custom_call.1} parent=1 // pred_fallthru
      _
    %659 = vsyncpa [#allocation7], 1
  %660 = vsyncmov [#allocation3]
  %s661 = vpop.sfrf %660
  %p662 = scmp.eq.s32.totalorder %s661, 0
  %p663 = pneg %p662
  %665 = shalt.err (%p663)
  %s666 = scalar_lea.sflag [#allocation3], 1
  %667 = vsyncmov %s666
  %s668 = vpop.sfrf %667
  %p669 = scmp.eq.s32.totalorder %s668, 0
  %p670 = pneg %p669
  %672 = shalt.err (%p670)
  %s673 = scalar_lea.sflag [#allocation3], 2
  %674 = vsyncmov %s673
  %s675 = vpop.sfrf %674
  %p676 = scmp.eq.s32.totalorder %s675, 0
  %p677 = pneg %p676
  %679 = shalt.err (%p677)
  %s680 = scalar_lea.sflag [#allocation3], 3
  %681 = vsyncmov %s680
  %s682 = vpop.sfrf %681
  %p683 = scmp.eq.s32.totalorder %s682, 0
  %p684 = pneg %p683
  %686 = shalt.err (%p684)
  %s687 = scalar_lea.sflag [#allocation3], 4
  %688 = vsyncmov %s687
  %s689 = vpop.sfrf %688
  %p690 = scmp.eq.s32.totalorder %s689, 0
  %p691 = pneg %p690
  %693 = shalt.err (%p691)
  %s694 = scalar_lea.sflag [#allocation3], 5
  %695 = vsyncmov %s694
  %s696 = vpop.sfrf %695
  %p697 = scmp.eq.s32.totalorder %s696, 0
  %p698 = pneg %p697
  %700 = shalt.err (%p698)
  %s701 = scalar_lea.sflag [#allocation3], 6
  %702 = vsyncmov %s701
  %s703 = vpop.sfrf %702
  %p704 = scmp.eq.s32.totalorder %s703, 0
  %p705 = pneg %p704
  %707 = shalt.err (%p705)
  %s708 = scalar_lea.sflag [#allocation3], 7
  %709 = vsyncmov %s708
  %s710 = vpop.sfrf %709
  %p711 = scmp.eq.s32.totalorder %s710, 0
  %p712 = pneg %p711
  %714 = shalt.err (%p712)
  %s715 = scalar_lea.sflag [#allocation3], 8
  %716 = vsyncmov %s715
  %s717 = vpop.sfrf %716
  %p718 = scmp.eq.s32.totalorder %s717, 0
  %p719 = pneg %p718
  %721 = shalt.err (%p719)
  %s722 = scalar_lea.sflag [#allocation3], 9
  %723 = vsyncmov %s722
  %s724 = vpop.sfrf %723
  %p725 = scmp.eq.s32.totalorder %s724, 0
  %p726 = pneg %p725
  %728 = shalt.err (%p726)
  %s729 = scalar_lea.sflag [#allocation3], 10
  %730 = vsyncmov %s729
  %s731 = vpop.sfrf %730
  %p732 = scmp.eq.s32.totalorder %s731, 0
  %p733 = pneg %p732
  %735 = shalt.err (%p733)
  %s736 = scalar_lea.sflag [#allocation3], 11
  %737 = vsyncmov %s736
  %s738 = vpop.sfrf %737
  %p739 = scmp.eq.s32.totalorder %s738, 0
  %p740 = pneg %p739
  %742 = shalt.err (%p740)
  %s743 = scalar_lea.sflag [#allocation3], 12
  %744 = vsyncmov %s743
  %s745 = vpop.sfrf %744
  %p746 = scmp.eq.s32.totalorder %s745, 0
  %p747 = pneg %p746
  %749 = shalt.err (%p747)
  %s750 = scalar_lea.sflag [#allocation3], 13
  %751 = vsyncmov %s750
  %s752 = vpop.sfrf %751
  %p753 = scmp.eq.s32.totalorder %s752, 0
  %p754 = pneg %p753
  %756 = shalt.err (%p754)
  %s757 = scalar_lea.sflag [#allocation3], 14
  %758 = vsyncmov %s757
  %s759 = vpop.sfrf %758
  %p760 = scmp.eq.s32.totalorder %s759, 0
  %p761 = pneg %p760
  %763 = shalt.err (%p761)
  %s764 = scalar_lea.sflag [#allocation3], 15
  %765 = vsyncmov %s764
  %s766 = vpop.sfrf %765
  %p767 = scmp.eq.s32.totalorder %s766, 0
  %p768 = pneg %p767
  %770 = shalt.err (%p768)
  %s771 = scalar_lea.sflag [#allocation3], 16
  %772 = vsyncmov %s771
  %s773 = vpop.sfrf %772
  %p774 = scmp.eq.s32.totalorder %s773, 0
  %p775 = pneg %p774
  %777 = shalt.err (%p775)
  %s778 = scalar_lea.sflag [#allocation3], 17
  %779 = vsyncmov %s778
  %s780 = vpop.sfrf %779
  %p781 = scmp.eq.s32.totalorder %s780, 0
  %p782 = pneg %p781
  %784 = shalt.err (%p782)
  %s785 = scalar_lea.sflag [#allocation3], 18
  %786 = vsyncmov %s785
  %s787 = vpop.sfrf %786
  %p788 = scmp.eq.s32.totalorder %s787, 0
  %p789 = pneg %p788
  %791 = shalt.err (%p789)
  %s792 = scalar_lea.sflag [#allocation3], 19
  %793 = vsyncmov %s792
  %s794 = vpop.sfrf %793
  %p795 = scmp.eq.s32.totalorder %s794, 0
  %p796 = pneg %p795
  %798 = shalt.err (%p796)
  %s799 = scalar_lea.sflag [#allocation3], 20
  %800 = vsyncmov %s799
  %s801 = vpop.sfrf %800
  %p802 = scmp.eq.s32.totalorder %s801, 0
  %p803 = pneg %p802
  %805 = shalt.err (%p803)
  %s806 = scalar_lea.sflag [#allocation3], 21
  %807 = vsyncmov %s806
  %s808 = vpop.sfrf %807
  %p809 = scmp.eq.s32.totalorder %s808, 0
  %p810 = pneg %p809
  %812 = shalt.err (%p810)
  %s813 = scalar_lea.sflag [#allocation3], 22
  %814 = vsyncmov %s813
  %s815 = vpop.sfrf %814
  %p816 = scmp.eq.s32.totalorder %s815, 0
  %p817 = pneg %p816
  %819 = shalt.err (%p817)
  %s820 = scalar_lea.sflag [#allocation3], 23
  %821 = vsyncmov %s820
  %s822 = vpop.sfrf %821
  %p823 = scmp.eq.s32.totalorder %s822, 0
  %p824 = pneg %p823
  %826 = shalt.err (%p824)
  %s827 = scalar_lea.sflag [#allocation3], 24
  %828 = vsyncmov %s827
  %s829 = vpop.sfrf %828
  %p830 = scmp.eq.s32.totalorder %s829, 0
  %p831 = pneg %p830
  %833 = shalt.err (%p831)
  %s834 = scalar_lea.sflag [#allocation3], 25
  %835 = vsyncmov %s834
  %s836 = vpop.sfrf %835
  %p837 = scmp.eq.s32.totalorder %s836, 0
  %p838 = pneg %p837
  %840 = shalt.err (%p838)
  %s841 = scalar_lea.sflag [#allocation3], 26
  %842 = vsyncmov %s841
  %s843 = vpop.sfrf %842
  %p844 = scmp.eq.s32.totalorder %s843, 0
  %p845 = pneg %p844
  %847 = shalt.err (%p845)
  %s848 = scalar_lea.sflag [#allocation3], 27
  %849 = vsyncmov %s848
  %s850 = vpop.sfrf %849
  %p851 = scmp.eq.s32.totalorder %s850, 0
  %p852 = pneg %p851
  %854 = shalt.err (%p852)
  %s855 = scalar_lea.sflag [#allocation3], 28
  %856 = vsyncmov %s855
  %s857 = vpop.sfrf %856
  %p858 = scmp.eq.s32.totalorder %s857, 0
  %p859 = pneg %p858
  %861 = shalt.err (%p859)
  %s862 = scalar_lea.sflag [#allocation3], 29
  %863 = vsyncmov %s862
  %s864 = vpop.sfrf %863
  %p865 = scmp.eq.s32.totalorder %s864, 0
  %p866 = pneg %p865
  %868 = shalt.err (%p866)
  %s869 = scalar_lea.sflag [#allocation3], 30
  %870 = vsyncmov %s869
  %s871 = vpop.sfrf %870
  %p872 = scmp.eq.s32.totalorder %s871, 0
  %p873 = pneg %p872
  %875 = shalt.err (%p873)
  %s876 = scalar_lea.sflag [#allocation3], 31
  %877 = vsyncmov %s876
  %s878 = vpop.sfrf %877
  %p879 = scmp.eq.s32.totalorder %s878, 0
  %p880 = pneg %p879
  %882 = shalt.err (%p880)

</llo_original>
